<compile_context>
chip_gen: v6e
topology: v6e:2x2x1
jax: 0.10.0
libtpu: 0.0.40
codegen_flags: <defaults>
</compile_context>

<pallas_src>
import functools

import jax
import jax.numpy as jnp
from jax.experimental import pallas as pl
from jax.experimental.pallas import tpu as pltpu


# ----------------------------- Pallas kernel --------------------------------
def gcn_head_kernel(x_ref,             # (BB, N, C) f32  tensorbank nodes
                    w3_ref, b3_ref,    # transdim3 : (C, C) bf16, (1, C) f32
                    w1_ref, b1_ref,    # transdim  : (C, C) bf16, (1, C) f32
                    wg1_ref, bg1_ref,  # graphconv1: (C, C) bf16, (1, C) f32
                    out_ref,           # (1, BB, C) f32  pooled feature (pre-bottleneck)
                    *, pool_scale):
    BB, N, C = x_ref.shape

    xf = x_ref[...].reshape(BB * N, C).astype(jnp.bfloat16)

    # --- transdim3 / transdim (1x1 conv + folded SyncBN + ReLU) --------------
    # Two separate matmuls: no (BB*N, 2C) intermediate, no in-kernel lane slices.
    g = jnp.maximum(
        jnp.dot(xf, w3_ref[...], preferred_element_type=jnp.float32) + b3_ref[...],
        0.0)                                                   # graph node feats, f32
    e = jnp.maximum(
        jnp.dot(xf, w1_ref[...], preferred_element_type=jnp.float32) + b1_ref[...],
        0.0)                                                   # edge feats, f32

    # --- gen_adj_sim: dynamic adjacency = cosine similarity of edge features
    # TODO(synk): exact gen_adj_sim() source not provided; standard cosine
    #             similarity adjacency is used here.
    inv_norm = jax.lax.rsqrt(jnp.sum(e * e, axis=-1, keepdims=True) + 1e-12)
    en = (e * inv_norm).reshape(BB, N, C).astype(jnp.bfloat16)
    sim = jax.lax.dot_general(                                 # (BB, N, N) f32
        en, en,
        dimension_numbers=(((2,), (2,)), ((0,), (0,))),
        preferred_element_type=jnp.float32)

    # --- norm_adj: A_hat = A + I ; D^-1/2 A_hat D^-1/2 -----------------------
    # TODO(synk): exact norm_adj() source not provided; symmetric GCN
    #             normalization with self loops is used here.
    # Identity is never materialized: deg = rowsum(sim) + 1 and the self-loop
    # is folded into the matvec below (A_hat @ Y == sim @ Y + Y).
    deg = jnp.maximum(jnp.sum(sim, axis=2, keepdims=True) + 1.0, 1e-6)
    dinv = jax.lax.rsqrt(deg)                                  # (BB, N, 1) f32
    sim_b = sim.astype(jnp.bfloat16)

    # --- graphconv1: dinv * (A_hat @ (dinv * (G @ Wg))) + b ------------------
    hw = jnp.dot(g.astype(jnp.bfloat16), wg1_ref[...],
                 preferred_element_type=jnp.float32).reshape(BB, N, C)
    hw_s = dinv * hw                                           # (BB, N, C) f32
    ah = jnp.einsum('bnm,bmc->bnc', sim_b, hw_s.astype(jnp.bfloat16),
                    preferred_element_type=jnp.float32) + hw_s  # A_hat @ Y
    h = dinv * ah + bg1_ref[...]
    h = jnp.where(h > 0.0, h, 0.2 * h)                         # LeakyReLU(0.2)

    # --- head reduction ------------------------------------------------------
    # graphpool branch collapses: softmax(f_pool, dim=-1) rows sum to 1 over
    # the pool axis M, so gpool.mean(1) == (N/M)*mean(h, 1) and
    # gfeature.mean(1) + gpool.mean(1) == (1 + N/M) * mean(h, axis=1).
    out_ref[0] = pool_scale * jnp.mean(h, axis=1)              # (BB, C)


# ------------------------- Generation-aware tiling ----------------------------
def _tiling_for_device(B):
    """Pick batch-block size and VMEM limit per TPU generation."""
    try:
        kind = jax.devices()[0].device_kind.lower()
    except Exception:  # pragma: no cover - defensive
        kind = ""
    if ("v5 lite" in kind) or ("v5e" in kind) or ("v5lite" in kind):
        bb, vmem = 8, 64 * 1024 * 1024          # v5e: 16 MiB scoped default is too small
    elif "v6" in kind:
        bb, vmem = 8, 96 * 1024 * 1024          # v6e: single TC, big block, 128 MiB phys
    elif "7" in kind:
        bb, vmem = 4, 48 * 1024 * 1024          # v7x: 64 MiB VMEM/core, 2 TCs
        # keep >=2 grid steps so both TensorCores get work
        while bb > 1 and -(-B // bb) < 2:
            bb //= 2
    else:
        bb, vmem = 4, 48 * 1024 * 1024          # conservative fallback
    return max(1, min(bb, B)), vmem


# ------------------------------- Wrapper -------------------------------------
def gcn_cluster_head(tensorbank_nodes, params, *, node_pool, bb=None):
    """tensorbank_nodes: (B, N, C) float32. Returns logits (B, num_classes)."""
    B, N, C = tensorbank_nodes.shape

    auto_bb, vmem_limit = _tiling_for_device(B)
    if bb is None:
        bb = auto_bb
    bb = max(1, min(bb, B))
    B_pad = ((B + bb - 1) // bb) * bb

    # No wrapper-side dtype cast pass over HBM: f32 blocks are DMA'd into the
    # kernel and cast to bf16 there (DMA fully hidden behind MXU work).
    x = tensorbank_nodes
    if B_pad != B:
        x = jnp.pad(x, ((0, B_pad - B), (0, 0), (0, 0)))
    G = B_pad // bb

    w3 = params["w3"].astype(jnp.bfloat16)
    w1 = params["w1"].astype(jnp.bfloat16)
    wg1 = params["wg1"].astype(jnp.bfloat16)

    # Constant (grid-invariant) weights: single-buffered.
    def const2d(shape):
        return pl.BlockSpec(shape, lambda i: (0, 0), pipeline_mode=pl.Buffered(1))

    pool_scale = 1.0 + float(N) / float(node_pool)   # gfeature.mean + gpool.mean collapse

    # MXU-dominated cost: 2 projections + graphconv weight (3*C) and
    # cosine-sim + adjacency matvec (2*N) per node per channel.
    flops = 2 * B_pad * N * C * (3 * C + 2 * N)
    bytes_accessed = (B_pad * N * C * 4               # x (f32 DMA)
                      + 3 * C * C * 2 + 3 * C * 4     # bf16 weights + f32 biases
                      + B_pad * C * 4)                # pooled output
    cost = pl.CostEstimate(flops=flops,
                           transcendentals=2 * B_pad * N,
                           bytes_accessed=bytes_accessed)

    v = pl.pallas_call(
        functools.partial(gcn_head_kernel, pool_scale=pool_scale),
        out_shape=jax.ShapeDtypeStruct((G, bb, C), jnp.float32),
        grid_spec=pltpu.PrefetchScalarGridSpec(
            num_scalar_prefetch=0,
            grid=(G,),
            in_specs=[
                pl.BlockSpec((bb, N, C), lambda i: (i, 0, 0)),
                const2d((C, C)), const2d((1, C)),   # transdim3
                const2d((C, C)), const2d((1, C)),   # transdim
                const2d((C, C)), const2d((1, C)),   # graphconv1
            ],
            out_specs=pl.BlockSpec((1, bb, C), lambda i: (i, 0, 0)),
        ),
        compiler_params=pltpu.CompilerParams(
            dimension_semantics=("parallel",),
            vmem_limit_bytes=vmem_limit,
        ),
        cost_estimate=cost,
    )(x, w3, params["b3"], w1, params["b1"], wg1, params["bg1"])

    v = v.reshape(B_pad, C)[:B]                       # (B, C) pooled features

    # Bottleneck BatchNorm1d (eval, folded) + classifier as a real batched
    # matmul in XLA:  (v*s + t) @ Wc  ==  v @ (s^T * Wc) + t @ Wc
    wc_eff = params["bn_scale"].reshape(C, 1) * params["wc"]
    b_eff = params["bn_shift"] @ params["wc"]
    return v @ wc_eff + b_eff


# ------------------------- Deterministic parameter init ----------------------
def make_params(key, C, num_classes):
    ks = jax.random.split(key, 8)
    eps = 1e-5
    bn_fold = 1.0 / jnp.sqrt(1.0 + eps)   # gamma=1, beta=0, mean=0, var=1 (fresh BN)

    def kaiming(k, fan_in, shape):
        return jax.random.normal(k, shape, jnp.float32) * jnp.sqrt(2.0 / fan_in)

    # transdim / transdim3: Conv2d(C,C,1) kaiming, bias=0, SyncBN folded, ReLU
    w1 = kaiming(ks[0], C, (C, C)) * bn_fold
    b1 = jnp.zeros((1, C), jnp.float32)
    w3 = kaiming(ks[1], C, (C, C)) * bn_fold
    b3 = jnp.zeros((1, C), jnp.float32)
    # graphconv1 (weights_init_kaiming 'Conv' branch), bias 0
    wg1 = kaiming(ks[2], C, (C, C))
    bg1 = jnp.zeros((1, C), jnp.float32)
    # NOTE: graphpool (GCNConv(C, node_pool)) weights have no effect on the
    # forward output (softmax rows sum to 1 -> gpool.mean(1) is a scalar
    # multiple of mean(h,1)), so they are not instantiated here.
    # bottleneck BatchNorm1d (gamma=1, beta=0), eval-mode fold
    bn_scale = jnp.full((1, C), bn_fold, jnp.float32)
    bn_shift = jnp.zeros((1, C), jnp.float32)
    # classifier Linear(C, num_classes, bias=False), std=0.001
    wc = jax.random.normal(ks[4], (C, num_classes), jnp.float32) * 0.001
    return dict(w1=w1, b1=b1, w3=w3, b3=b3, wg1=wg1, bg1=bg1,
                bn_scale=bn_scale, bn_shift=bn_shift, wc=wc)


# --------------- Synthetic base + HRD (tensorbank builder) glue --------------
# TODO(synk): resnet50_crosslevel / GatedTensorBankbuilter / Norm_F('constant')
# sources are not provided; a small deterministic bilinear-attention tensorbank
# stand-in is used (attention-weighted pooling of pointwise-conv features).
def synthetic_tensorbank(x_nchw, key, C, N):
    B, Cin, H, W = x_nchw.shape
    kf, ka = jax.random.split(key)
    wf = jax.random.normal(kf, (Cin, C), jnp.float32) * jnp.sqrt(2.0 / Cin)
    wa = jax.random.normal(ka, (Cin, N), jnp.float32) * jnp.sqrt(2.0 / Cin)
    feats = jnp.maximum(jnp.einsum("bchw,cd->bdhw", x_nchw, wf), 0.0)   # (B, C, H, W)
    attn = jnp.maximum(jnp.einsum("bchw,cp->bphw", x_nchw, wa), 0.0)    # (B, N, H, W)
    f = feats.reshape(B, C, H * W)
    a = attn.reshape(B, N, H * W)
    tb = jnp.einsum("bcl,bnl->bcn", f, a) / float(H * W)                # (B, C, N)
    return jnp.transpose(tb, (0, 2, 1))                                  # (B, N, C)


# ---------------------------------- Main --------------------------------------
if __name__ == "__main__":
    # Small demo shapes (original module: C=512 hidden, N=512 parts, pool=64)
    B, Cin, H, W = 4, 3, 16, 16
    C, N, M, NUM_CLASSES = 128, 64, 64, 16

    key = jax.random.PRNGKey(0)
    k_x, k_base, k_params = jax.random.split(key, 3)

    x = jax.random.normal(k_x, (B, Cin, H, W), jnp.float32)     # NCHW input image
    tb_nodes = synthetic_tensorbank(x, k_base, C, N)            # (B, N, C) f32
    params = make_params(k_params, C, NUM_CLASSES)

    logits = gcn_cluster_head(tb_nodes, params, node_pool=M)
    logits = jax.block_until_ready(logits)
    assert logits.shape == (B, NUM_CLASSES)
    assert bool(jnp.all(jnp.isfinite(logits)))
    print("KERNEL_OK")
</pallas_src>

<mosaic_0001>
module attributes {stable_mosaic.version = 11 : i64} {
  func.func @gcn_head_kernel(%arg0: i32, %arg1: memref<4x64x128xf32, #tpu.memory_space<vmem>>, %arg2: memref<128x128xbf16, #tpu.memory_space<vmem>>, %arg3: memref<1x128xf32, #tpu.memory_space<vmem>>, %arg4: memref<128x128xbf16, #tpu.memory_space<vmem>>, %arg5: memref<1x128xf32, #tpu.memory_space<vmem>>, %arg6: memref<128x128xbf16, #tpu.memory_space<vmem>>, %arg7: memref<1x128xf32, #tpu.memory_space<vmem>>, %arg8: memref<1x4x128xf32, #tpu.memory_space<vmem>>) attributes {dimension_semantics = [#tpu.dimension_semantics<parallel>], iteration_bounds = array<i64: 1>, scalar_prefetch = 0 : i64, scratch_operands = 0 : i64, tpu.core_type = #tpu.core_type<tc>, window_params = [{transform_indices = @transform_0, window_bounds = array<i64: 4, 64, 128>}, {pipeline_mode = #tpu.pipeline_mode<synchronous>, transform_indices = @transform_1, window_bounds = array<i64: 128, 128>}, {pipeline_mode = #tpu.pipeline_mode<synchronous>, transform_indices = @transform_2, window_bounds = array<i64: 1, 128>}, {pipeline_mode = #tpu.pipeline_mode<synchronous>, transform_indices = @transform_3, window_bounds = array<i64: 128, 128>}, {pipeline_mode = #tpu.pipeline_mode<synchronous>, transform_indices = @transform_4, window_bounds = array<i64: 1, 128>}, {pipeline_mode = #tpu.pipeline_mode<synchronous>, transform_indices = @transform_5, window_bounds = array<i64: 128, 128>}, {pipeline_mode = #tpu.pipeline_mode<synchronous>, transform_indices = @transform_6, window_bounds = array<i64: 1, 128>}, {transform_indices = @transform_7, window_bounds = array<i64: 1, 4, 128>}]} {
    %c0 = arith.constant 0 : index
    %c0_0 = arith.constant 0 : index
    %c0_1 = arith.constant 0 : index
    %0 = vector.load %arg1[%c0, %c0_0, %c0_1] : memref<4x64x128xf32, #tpu.memory_space<vmem>>, vector<4x64x128xf32>
    %1 = vector.shape_cast %0 : vector<4x64x128xf32> to vector<256x128xf32>
    %2 = arith.truncf %1 : vector<256x128xf32> to vector<256x128xbf16>
    %c0_2 = arith.constant 0 : index
    %c0_3 = arith.constant 0 : index
    %3 = vector.load %arg2[%c0_2, %c0_3] : memref<128x128xbf16, #tpu.memory_space<vmem>>, vector<128x128xbf16>
    %cst = arith.constant dense<0.000000e+00> : vector<256x128xf32>
    %4 = tpu.matmul %2, %3, %cst {dimension_numbers = #tpu.dot_dimension_numbers<[1], [0], [0], [1], [0, 0, 1, 1], [], []>} : vector<256x128xbf16>, vector<128x128xbf16>, vector<256x128xf32> -> vector<256x128xf32>
    %c0_4 = arith.constant 0 : index
    %c0_5 = arith.constant 0 : index
    %5 = vector.load %arg3[%c0_4, %c0_5] : memref<1x128xf32, #tpu.memory_space<vmem>>, vector<1x128xf32>
    %6 = vector.broadcast %5 : vector<1x128xf32> to vector<256x128xf32>
    %7 = arith.addf %4, %6 : vector<256x128xf32>
    %cst_6 = arith.constant 0.000000e+00 : f32
    %8 = vector.broadcast %cst_6 : f32 to vector<256x128xf32>
    %9 = arith.maximumf %7, %8 : vector<256x128xf32>
    %c0_7 = arith.constant 0 : index
    %c0_8 = arith.constant 0 : index
    %10 = vector.load %arg4[%c0_7, %c0_8] : memref<128x128xbf16, #tpu.memory_space<vmem>>, vector<128x128xbf16>
    %cst_9 = arith.constant dense<0.000000e+00> : vector<256x128xf32>
    %11 = tpu.matmul %2, %10, %cst_9 {dimension_numbers = #tpu.dot_dimension_numbers<[1], [0], [0], [1], [0, 0, 1, 1], [], []>} : vector<256x128xbf16>, vector<128x128xbf16>, vector<256x128xf32> -> vector<256x128xf32>
    %c0_10 = arith.constant 0 : index
    %c0_11 = arith.constant 0 : index
    %12 = vector.load %arg5[%c0_10, %c0_11] : memref<1x128xf32, #tpu.memory_space<vmem>>, vector<1x128xf32>
    %13 = vector.broadcast %12 : vector<1x128xf32> to vector<256x128xf32>
    %14 = arith.addf %11, %13 : vector<256x128xf32>
    %cst_12 = arith.constant 0.000000e+00 : f32
    %15 = vector.broadcast %cst_12 : f32 to vector<256x128xf32>
    %16 = arith.maximumf %14, %15 : vector<256x128xf32>
    %17 = arith.mulf %16, %16 : vector<256x128xf32>
    %cst_13 = arith.constant dense<0.000000e+00> : vector<256xf32>
    %18 = vector.multi_reduction <add>, %17, %cst_13 [1] : vector<256x128xf32> to vector<256xf32>
    %19 = vector.shape_cast %18 : vector<256xf32> to vector<256x1xf32>
    %cst_14 = arith.constant 9.99999996E-13 : f32
    %20 = vector.broadcast %cst_14 : f32 to vector<256x1xf32>
    %21 = arith.addf %19, %20 : vector<256x1xf32>
    %22 = math.rsqrt %21 : vector<256x1xf32>
    %23 = vector.broadcast %22 : vector<256x1xf32> to vector<256x128xf32>
    %24 = arith.mulf %16, %23 : vector<256x128xf32>
    %25 = vector.shape_cast %24 : vector<256x128xf32> to vector<4x64x128xf32>
    %26 = arith.truncf %25 : vector<4x64x128xf32> to vector<4x64x128xbf16>
    %cst_15 = arith.constant dense<0.000000e+00> : vector<4x64x64xf32>
    %27 = tpu.matmul %26, %26, %cst_15 {dimension_numbers = #tpu.dot_dimension_numbers<[2], [2], [1], [1], [0, 0, 0, 1, 1, 1], [0], [0]>} : vector<4x64x128xbf16>, vector<4x64x128xbf16>, vector<4x64x64xf32> -> vector<4x64x64xf32>
    %cst_16 = arith.constant dense<0.000000e+00> : vector<4x64xf32>
    %28 = vector.multi_reduction <add>, %27, %cst_16 [2] : vector<4x64x64xf32> to vector<4x64xf32>
    %29 = vector.shape_cast %28 : vector<4x64xf32> to vector<4x64x1xf32>
    %cst_17 = arith.constant 1.000000e+00 : f32
    %30 = vector.broadcast %cst_17 : f32 to vector<4x64x1xf32>
    %31 = arith.addf %29, %30 : vector<4x64x1xf32>
    %cst_18 = arith.constant 9.99999997E-7 : f32
    %32 = vector.broadcast %cst_18 : f32 to vector<4x64x1xf32>
    %33 = arith.maximumf %31, %32 : vector<4x64x1xf32>
    %34 = math.rsqrt %33 : vector<4x64x1xf32>
    %35 = arith.truncf %27 : vector<4x64x64xf32> to vector<4x64x64xbf16>
    %36 = arith.truncf %9 : vector<256x128xf32> to vector<256x128xbf16>
    %c0_19 = arith.constant 0 : index
    %c0_20 = arith.constant 0 : index
    %37 = vector.load %arg6[%c0_19, %c0_20] : memref<128x128xbf16, #tpu.memory_space<vmem>>, vector<128x128xbf16>
    %cst_21 = arith.constant dense<0.000000e+00> : vector<256x128xf32>
    %38 = tpu.matmul %36, %37, %cst_21 {dimension_numbers = #tpu.dot_dimension_numbers<[1], [0], [0], [1], [0, 0, 1, 1], [], []>} : vector<256x128xbf16>, vector<128x128xbf16>, vector<256x128xf32> -> vector<256x128xf32>
    %39 = vector.shape_cast %38 : vector<256x128xf32> to vector<4x64x128xf32>
    %40 = vector.broadcast %34 : vector<4x64x1xf32> to vector<4x64x128xf32>
    %41 = arith.mulf %40, %39 : vector<4x64x128xf32>
    %42 = arith.truncf %41 : vector<4x64x128xf32> to vector<4x64x128xbf16>
    "tpu.trace_start"() <{level = 10 : i32, message = "bnm,bmc->bnc"}> : () -> ()
    %cst_22 = arith.constant dense<0.000000e+00> : vector<4x64x128xf32>
    %43 = tpu.matmul %35, %42, %cst_22 {dimension_numbers = #tpu.dot_dimension_numbers<[2], [1], [1], [2], [0, 0, 0, 1, 1, 2], [0], [0]>} : vector<4x64x64xbf16>, vector<4x64x128xbf16>, vector<4x64x128xf32> -> vector<4x64x128xf32>
    "tpu.trace_stop"() : () -> ()
    %44 = arith.addf %43, %41 : vector<4x64x128xf32>
    %45 = vector.broadcast %34 : vector<4x64x1xf32> to vector<4x64x128xf32>
    %46 = arith.mulf %45, %44 : vector<4x64x128xf32>
    %c0_23 = arith.constant 0 : index
    %c0_24 = arith.constant 0 : index
    %47 = vector.load %arg7[%c0_23, %c0_24] : memref<1x128xf32, #tpu.memory_space<vmem>>, vector<1x128xf32>
    %48 = vector.shape_cast %47 : vector<1x128xf32> to vector<1x1x128xf32>
    %49 = vector.broadcast %48 : vector<1x1x128xf32> to vector<4x64x128xf32>
    %50 = arith.addf %46, %49 : vector<4x64x128xf32>
    %cst_25 = arith.constant 0.000000e+00 : f32
    %51 = vector.broadcast %cst_25 : f32 to vector<4x64x128xf32>
    %52 = arith.cmpf ogt, %50, %51 : vector<4x64x128xf32>
    %cst_26 = arith.constant 2.000000e-01 : f32
    %53 = vector.broadcast %cst_26 : f32 to vector<4x64x128xf32>
    %54 = arith.mulf %53, %50 : vector<4x64x128xf32>
    %55 = arith.select %52, %50, %54 : vector<4x64x128xi1>, vector<4x64x128xf32>
    %cst_27 = arith.constant dense<0.000000e+00> : vector<4x128xf32>
    %56 = vector.multi_reduction <add>, %55, %cst_27 [1] : vector<4x64x128xf32> to vector<4x128xf32>
    %cst_28 = arith.constant 6.400000e+01 : f32
    %57 = vector.broadcast %cst_28 : f32 to vector<4x128xf32>
    %58 = arith.divf %56, %57 : vector<4x128xf32>
    %cst_29 = arith.constant 2.000000e+00 : f32
    %59 = vector.broadcast %cst_29 : f32 to vector<4x128xf32>
    %60 = arith.mulf %59, %58 : vector<4x128xf32>
    %c0_30 = arith.constant 0 : index
    %c0_31 = arith.constant 0 : index
    %c0_32 = arith.constant 0 : index
    %61 = vector.load %arg8[%c0_30, %c0_31, %c0_32] : memref<1x4x128xf32, #tpu.memory_space<vmem>>, vector<1x4x128xf32>
    %62 = vector.shape_cast %61 : vector<1x4x128xf32> to vector<4x128xf32>
    %63 = vector.shape_cast %60 : vector<4x128xf32> to vector<1x4x128xf32>
    tpu.vector_store %arg8[%c0_30, %c0_31, %c0_32], %63 {strides = array<i32>} : memref<1x4x128xf32, #tpu.memory_space<vmem>>, vector<1x4x128xf32>,
    return
  }
  func.func @transform_0(%arg0: i32) -> (i32, i32, i32) {
    %c0_i32 = arith.constant 0 : i32
    %c0_i32_0 = arith.constant 0 : i32
    %c0_i32_1 = arith.constant 0 : i32
    return %arg0, %c0_i32, %c0_i32_0 : i32, i32, i32
  }
  func.func @transform_1(%arg0: i32) -> (i32, i32) {
    %c0_i32 = arith.constant 0 : i32
    %c0_i32_0 = arith.constant 0 : i32
    %c0_i32_1 = arith.constant 0 : i32
    return %c0_i32, %c0_i32_0 : i32, i32
  }
  func.func @transform_2(%arg0: i32) -> (i32, i32) {
    %c0_i32 = arith.constant 0 : i32
    %c0_i32_0 = arith.constant 0 : i32
    %c0_i32_1 = arith.constant 0 : i32
    return %c0_i32, %c0_i32_0 : i32, i32
  }
  func.func @transform_3(%arg0: i32) -> (i32, i32) {
    %c0_i32 = arith.constant 0 : i32
    %c0_i32_0 = arith.constant 0 : i32
    %c0_i32_1 = arith.constant 0 : i32
    return %c0_i32, %c0_i32_0 : i32, i32
  }
  func.func @transform_4(%arg0: i32) -> (i32, i32) {
    %c0_i32 = arith.constant 0 : i32
    %c0_i32_0 = arith.constant 0 : i32
    %c0_i32_1 = arith.constant 0 : i32
    return %c0_i32, %c0_i32_0 : i32, i32
  }
  func.func @transform_5(%arg0: i32) -> (i32, i32) {
    %c0_i32 = arith.constant 0 : i32
    %c0_i32_0 = arith.constant 0 : i32
    %c0_i32_1 = arith.constant 0 : i32
    return %c0_i32, %c0_i32_0 : i32, i32
  }
  func.func @transform_6(%arg0: i32) -> (i32, i32) {
    %c0_i32 = arith.constant 0 : i32
    %c0_i32_0 = arith.constant 0 : i32
    %c0_i32_1 = arith.constant 0 : i32
    return %c0_i32, %c0_i32_0 : i32, i32
  }
  func.func @transform_7(%arg0: i32) -> (i32, i32, i32) {
    %c0_i32 = arith.constant 0 : i32
    %c0_i32_0 = arith.constant 0 : i32
    %c0_i32_1 = arith.constant 0 : i32
    return %arg0, %c0_i32, %c0_i32_0 : i32, i32, i32
  }
}

</mosaic_0001>

<llo_original>
// kernel: tpu_custom_call.1
$region0: #{tpu_custom_call.1}
  #allocation0 [shape = 'u32[]', space=smem, size = 0x4, offset = 0x4, fixed_abs, tag = 'smem constant byte address 0x4 - core index']
  #allocation1 [shape = 'u32[144,128]{1,0:T(1,128)}', space=vmem, size = 0x12000, scoped, tag = 'internal scratch']
  %s0 = inlined_call_operand.hbm [shape: f32[4,64,128], index: 0, kind: input, shape index: {}]
  %s1 = inlined_call_operand.hbm [shape: bf16[128,128], index: 1, kind: input, shape index: {}]
  %s2 = inlined_call_operand.vmem [shape: f32[1,128], index: 2, kind: input, shape index: {}]
  %s3 = inlined_call_operand.hbm [shape: bf16[128,128], index: 3, kind: input, shape index: {}]
  %s4 = inlined_call_operand.vmem [shape: f32[1,128], index: 4, kind: input, shape index: {}]
  %s5 = inlined_call_operand.hbm [shape: bf16[128,128], index: 5, kind: input, shape index: {}]
  %s6 = inlined_call_operand.vmem [shape: f32[1,128], index: 6, kind: input, shape index: {}]
  %s7 = inlined_call_operand.hbm [shape: f32[1,4,128], index: 7, kind: output, shape index: {}]
  %s8 = sld [smem:[#allocation0]]
  $region54: #{tpu_custom_call.1} parent=0
    _
  %s10 = ssub.s32 1, %s8
  %s11 = scalar_select 0, %s10, %s8
  $region1: #{tpu_custom_call.1} parent=0
    #allocation2 [shape = 'u8[131072]{0}', space=vmem, size = 0x20000, scoped, tag = 'input window, operand 0, single buffered']
    #allocation3 [shape = 's32[1]{0}', space=sflag, size = 0x4, scoped, tag = 'scoped memory for tpu_custom_call.1']
    #allocation4 [shape = 's32[1]{0}', space=sflag, size = 0x4, scoped, tag = 'scoped memory for tpu_custom_call.1']
    #allocation5 [shape = 'u8[32768]{0}', space=vmem, size = 0x8000, scoped, tag = 'input window, operand 1, single buffered']
    #allocation6 [shape = 's32[1]{0}', space=sflag, size = 0x4, scoped, tag = 'scoped memory for tpu_custom_call.1']
    #allocation7 [shape = 'u8[32768]{0}', space=vmem, size = 0x8000, scoped, tag = 'input window, operand 3, single buffered']
    #allocation8 [shape = 'u8[32768]{0}', space=vmem, size = 0x8000, scoped, tag = 'input window, operand 5, single buffered']
    #allocation9 [shape = 's32[1]{0}', space=sflag, size = 0x4, scoped, tag = 'scoped memory for tpu_custom_call.1']
    #allocation10 [shape = 'u8[2048]{0}', space=vmem, size = 0x800, scoped, tag = 'output window, operand 0, single buffered']
    %12 = vsyncpa [#allocation3], 0
    %13 = vsyncpa [#allocation6], 0
    %14 = vsyncpa [#allocation9], 0
    %15 = vsyncpa [#allocation4], 0
    // Predicated region
    $region2: #{tpu_custom_call.1} parent=1 // pred_check
      _
    $region3: #{tpu_custom_call.1} parent=1 // pred_check_branch
      %17 = sbr.rel (0) target = $region5
    $region4: #{tpu_custom_call.1} parent=1 // pred_region
      %s19 = ssub.s32 4096, 4096
      %20 = vsyncadd [#allocation3], %s19
      %s21 = sshll.u32 [#allocation2], 4
      %s22 = int_to_ptr.vmem [resolvable:$true] %s21
      %27 = dma.hbm_to_vmem [thread:$0]  %s0, 4096, %s22, [#allocation3], 128, 128, 8
    $region5: #{tpu_custom_call.1} parent=1 // pred_fallthru
      _
    // Predicated region
    $region6: #{tpu_custom_call.1} parent=1 // pred_check
      _
    $region7: #{tpu_custom_call.1} parent=1 // pred_check_branch
      %29 = sbr.rel (0) target = $region9
    $region8: #{tpu_custom_call.1} parent=1 // pred_region
      %s31 = ssub.s32 1024, 1024
      %32 = vsyncadd [#allocation6], %s31
      %s33 = sshll.u32 [#allocation5], 4
      %s34 = int_to_ptr.vmem [resolvable:$true] %s33
      %39 = dma.hbm_to_vmem [thread:$0]  %s1, 1024, %s34, [#allocation6], 64, 64, 4
    $region9: #{tpu_custom_call.1} parent=1 // pred_fallthru
      _
    // Predicated region
    $region10: #{tpu_custom_call.1} parent=1 // pred_check
      _
    $region11: #{tpu_custom_call.1} parent=1 // pred_check_branch
      %41 = sbr.rel (0) target = $region13
    $region12: #{tpu_custom_call.1} parent=1 // pred_region
      _
    $region13: #{tpu_custom_call.1} parent=1 // pred_fallthru
      _
    // Predicated region
    $region14: #{tpu_custom_call.1} parent=1 // pred_check
      _
    $region15: #{tpu_custom_call.1} parent=1 // pred_check_branch
      %43 = sbr.rel (0) target = $region17
    $region16: #{tpu_custom_call.1} parent=1 // pred_region
      %s45 = ssub.s32 1024, 1024
      %46 = vsyncadd [#allocation6], %s45
      %s47 = sshll.u32 [#allocation7], 4
      %s48 = int_to_ptr.vmem [resolvable:$true] %s47
      %53 = dma.hbm_to_vmem [thread:$0]  %s3, 1024, %s48, [#allocation6], 64, 64, 4
    $region17: #{tpu_custom_call.1} parent=1 // pred_fallthru
      _
    // Predicated region
    $region18: #{tpu_custom_call.1} parent=1 // pred_check
      _
    $region19: #{tpu_custom_call.1} parent=1 // pred_check_branch
      %55 = sbr.rel (0) target = $region21
    $region20: #{tpu_custom_call.1} parent=1 // pred_region
      _
    $region21: #{tpu_custom_call.1} parent=1 // pred_fallthru
      _
    // Predicated region
    $region22: #{tpu_custom_call.1} parent=1 // pred_check
      _
    $region23: #{tpu_custom_call.1} parent=1 // pred_check_branch
      %57 = sbr.rel (0) target = $region25
    $region24: #{tpu_custom_call.1} parent=1 // pred_region
      %s59 = ssub.s32 1024, 1024
      %60 = vsyncadd [#allocation9], %s59
      %s61 = sshll.u32 [#allocation8], 4
      %s62 = int_to_ptr.vmem [resolvable:$true] %s61
      %67 = dma.hbm_to_vmem [thread:$0]  %s5, 1024, %s62, [#allocation9], 64, 64, 4
    $region25: #{tpu_custom_call.1} parent=1 // pred_fallthru
      _
    // Predicated region
    $region26: #{tpu_custom_call.1} parent=1 // pred_check
      _
    $region27: #{tpu_custom_call.1} parent=1 // pred_check_branch
      %69 = sbr.rel (0) target = $region29
    $region28: #{tpu_custom_call.1} parent=1 // pred_region
      _
    $region29: #{tpu_custom_call.1} parent=1 // pred_fallthru
      _
    // Predicated region
    $region30: #{tpu_custom_call.1} parent=1 // pred_check
      _
    $region31: #{tpu_custom_call.1} parent=1 // pred_check_branch
      %71 = sbr.rel (0) target = $region33
    $region32: #{tpu_custom_call.1} parent=1 // pred_region
      %72 = dma.done [#allocation3], 4096
    $region33: #{tpu_custom_call.1} parent=1 // pred_fallthru
      _
    // Predicated region
    $region34: #{tpu_custom_call.1} parent=1 // pred_check
      _
    $region35: #{tpu_custom_call.1} parent=1 // pred_check_branch
      %74 = sbr.rel (0) target = $region37
    $region36: #{tpu_custom_call.1} parent=1 // pred_region
      %75 = dma.done [#allocation6], 1024
    $region37: #{tpu_custom_call.1} parent=1 // pred_fallthru
      _
    // Predicated region
    $region38: #{tpu_custom_call.1} parent=1 // pred_check
      _
    $region39: #{tpu_custom_call.1} parent=1 // pred_check_branch
      %77 = sbr.rel (0) target = $region41
    $region40: #{tpu_custom_call.1} parent=1 // pred_region
      %78 = dma.done [#allocation6], 1024
    $region41: #{tpu_custom_call.1} parent=1 // pred_fallthru
      _
    // Predicated region
    $region42: #{tpu_custom_call.1} parent=1 // pred_check
      _
    $region43: #{tpu_custom_call.1} parent=1 // pred_check_branch
      %80 = sbr.rel (0) target = $region45
    $region44: #{tpu_custom_call.1} parent=1 // pred_region
      %81 = dma.done [#allocation9], 1024
    $region45: #{tpu_custom_call.1} parent=1 // pred_fallthru
      _
    %v83 = vld [vmem:[#allocation2] sm:$0xff]
    %v84 = vld [vmem:[#allocation2 + $0x8] sm:$0xff]
    %v85 = vld [vmem:[#allocation2 + $0x10] sm:$0xff]
    %v86 = vld [vmem:[#allocation2 + $0x18] sm:$0xff]
    %v87 = vld [vmem:[#allocation2 + $0x20] sm:$0xff]
    %v88 = vld [vmem:[#allocation2 + $0x28] sm:$0xff]
    %v89 = vld [vmem:[#allocation2 + $0x30] sm:$0xff]
    %v90 = vld [vmem:[#allocation2 + $0x38] sm:$0xff]
    %v91 = vld [vmem:[#allocation2 + $0x40] sm:$0xff]
    %v92 = vld [vmem:[#allocation2 + $0x48] sm:$0xff]
    %v93 = vld [vmem:[#allocation2 + $0x50] sm:$0xff]
    %v94 = vld [vmem:[#allocation2 + $0x58] sm:$0xff]
    %v95 = vld [vmem:[#allocation2 + $0x60] sm:$0xff]
    %v96 = vld [vmem:[#allocation2 + $0x68] sm:$0xff]
    %v97 = vld [vmem:[#allocation2 + $0x70] sm:$0xff]
    %v98 = vld [vmem:[#allocation2 + $0x78] sm:$0xff]
    %v99 = vld [vmem:[#allocation2 + $0x80] sm:$0xff]
    %v100 = vld [vmem:[#allocation2 + $0x88] sm:$0xff]
    %v101 = vld [vmem:[#allocation2 + $0x90] sm:$0xff]
    %v102 = vld [vmem:[#allocation2 + $0x98] sm:$0xff]
    %v103 = vld [vmem:[#allocation2 + $0xa0] sm:$0xff]
    %v104 = vld [vmem:[#allocation2 + $0xa8] sm:$0xff]
    %v105 = vld [vmem:[#allocation2 + $0xb0] sm:$0xff]
    %v106 = vld [vmem:[#allocation2 + $0xb8] sm:$0xff]
    %v107 = vld [vmem:[#allocation2 + $0xc0] sm:$0xff]
    %v108 = vld [vmem:[#allocation2 + $0xc8] sm:$0xff]
    %v109 = vld [vmem:[#allocation2 + $0xd0] sm:$0xff]
    %v110 = vld [vmem:[#allocation2 + $0xd8] sm:$0xff]
    %v111 = vld [vmem:[#allocation2 + $0xe0] sm:$0xff]
    %v112 = vld [vmem:[#allocation2 + $0xe8] sm:$0xff]
    %v113 = vld [vmem:[#allocation2 + $0xf0] sm:$0xff]
    %v114 = vld [vmem:[#allocation2 + $0xf8] sm:$0xff]
    %v115 = vpack.c.bf16 %v84, %v83
    %v116 = vpack.c.bf16 %v86, %v85
    %v117 = vpack.c.bf16 %v88, %v87
    %v118 = vpack.c.bf16 %v90, %v89
    %v119 = vpack.c.bf16 %v92, %v91
    %v120 = vpack.c.bf16 %v94, %v93
    %v121 = vpack.c.bf16 %v96, %v95
    %v122 = vpack.c.bf16 %v98, %v97
    %v123 = vpack.c.bf16 %v100, %v99
    %v124 = vpack.c.bf16 %v102, %v101
    %v125 = vpack.c.bf16 %v104, %v103
    %v126 = vpack.c.bf16 %v106, %v105
    %v127 = vpack.c.bf16 %v108, %v107
    %v128 = vpack.c.bf16 %v110, %v109
    %v129 = vpack.c.bf16 %v112, %v111
    %v130 = vpack.c.bf16 %v114, %v113
    %v131 = vld [vmem:[#allocation5] sm:$0xf]
    %v132 = vld [vmem:[#allocation5 + $0x4] sm:$0xf]
    %v133 = vld [vmem:[#allocation5 + $0x8] sm:$0xf]
    %v134 = vld [vmem:[#allocation5 + $0xc] sm:$0xf]
    %v135 = vld [vmem:[#allocation5 + $0x10] sm:$0xf]
    %v136 = vld [vmem:[#allocation5 + $0x14] sm:$0xf]
    %v137 = vld [vmem:[#allocation5 + $0x18] sm:$0xf]
    %v138 = vld [vmem:[#allocation5 + $0x1c] sm:$0xf]
    %v139 = vld [vmem:[#allocation5 + $0x20] sm:$0xf]
    %v140 = vld [vmem:[#allocation5 + $0x24] sm:$0xf]
    %v141 = vld [vmem:[#allocation5 + $0x28] sm:$0xf]
    %v142 = vld [vmem:[#allocation5 + $0x2c] sm:$0xf]
    %v143 = vld [vmem:[#allocation5 + $0x30] sm:$0xf]
    %v144 = vld [vmem:[#allocation5 + $0x34] sm:$0xf]
    %v145 = vld [vmem:[#allocation5 + $0x38] sm:$0xf]
    %v146 = vld [vmem:[#allocation5 + $0x3c] sm:$0xf]
    %v147 = vld [vmem:[%s2] sm:$0x1]
    %v149 = vlaneseq
    %v150 = vshrl.u32 %v149, 7
    %v151 = vsub.s32 0, %v150
    %v152 = vrot.slane %v147, %v151
    %v170 = vunpack.c.l.b16 %v131
    %v171 = vunpack.c.l.b16 %v132
    %v172 = vunpack.c.l.b16 %v133
    %v173 = vunpack.c.l.b16 %v134
    %v174 = vunpack.c.l.b16 %v135
    %v175 = vunpack.c.l.b16 %v136
    %v176 = vunpack.c.l.b16 %v137
    %v177 = vunpack.c.l.b16 %v138
    %v178 = vunpack.c.l.b16 %v139
    %v179 = vunpack.c.l.b16 %v140
    %v180 = vunpack.c.l.b16 %v141
    %v181 = vunpack.c.l.b16 %v142
    %v182 = vunpack.c.l.b16 %v143
    %v183 = vunpack.c.l.b16 %v144
    %v184 = vunpack.c.l.b16 %v145
    %v185 = vunpack.c.l.b16 %v146
    %v186 = vpack.c.b16 %v171, %v170
    %v187 = vpack.c.b16 %v173, %v172
    %v188 = vpack.c.b16 %v175, %v174
    %v189 = vpack.c.b16 %v177, %v176
    %v190 = vpack.c.b16 %v179, %v178
    %v191 = vpack.c.b16 %v181, %v180
    %v192 = vpack.c.b16 %v183, %v182
    %v193 = vpack.c.b16 %v185, %v184
    %202 = vmatprep.subr.bf16.mxu0 0
    %203 = vmatpush1.bf16.msra.mxu0 %v193
    %204 = vmatprep.subr.bf16.mxu0 0
    %205 = vmatpush1.bf16.msra.mxu0 %v192
    %206 = vmatprep.subr.bf16.mxu0 0
    %207 = vmatpush1.bf16.msra.mxu0 %v191
    %208 = vmatprep.subr.bf16.mxu0 0
    %209 = vmatpush1.bf16.msra.mxu0 %v190
    %210 = vmatprep.subr.bf16.mxu0 0
    %211 = vmatpush1.bf16.msra.mxu0 %v189
    %212 = vmatprep.subr.bf16.mxu0 0
    %213 = vmatpush1.bf16.msra.mxu0 %v188
    %214 = vmatprep.subr.bf16.mxu0 0
    %215 = vmatpush1.bf16.msra.mxu0 %v187
    %216 = vmatprep.subr.bf16.mxu0 0
    %217 = vmatpush1.bf16.msra.mxu0 %v186
    %218 = vmatprep.subr.bf16.mxu0 0
    %219 = vmatpush2.bf16.msra.mxu0 0
    %220 = vmatprep.subr.bf16.mxu0 0
    %221 = vmatpush2.bf16.msra.mxu0 0
    %222 = vmatprep.subr.bf16.mxu0 0
    %223 = vmatpush2.bf16.msra.mxu0 0
    %224 = vmatprep.subr.bf16.mxu0 0
    %225 = vmatpush2.bf16.msra.mxu0 0
    %226 = vmatprep.subr.bf16.mxu0 0
    %227 = vmatpush2.bf16.msra.mxu0 0
    %228 = vmatprep.subr.bf16.mxu0 0
    %229 = vmatpush2.bf16.msra.mxu0 0
    %230 = vmatprep.subr.bf16.mxu0 0
    %231 = vmatpush2.bf16.msra.mxu0 0
    %232 = vmatprep.subr.bf16.mxu0 0
    %233 = vmatpush2.bf16.msra.mxu0 0
    %234 = vmatprep.mubr.bf16.mxu0 0
    %235 = vmatmul.mubr.bf16.gmra.mxu0 %v115
    %v236 = vpop.f32.mrf.mxu0
    %v237 = vadd.f32 %v152, %v236
    %v238 = vpop.f32.mrf.mxu0
    %v239 = vpop.f32.mrf.mxu0
    %v240 = vadd.f32 %v152, %v239
    %v241 = vpop.f32.mrf.mxu0
    %242 = vmatprep.mubr.bf16.mxu0 0
    %243 = vmatmul.mubr.bf16.gmra.mxu0 %v116
    %v244 = vpop.f32.mrf.mxu0
    %v245 = vadd.f32 %v152, %v244
    %v246 = vpop.f32.mrf.mxu0
    %v247 = vpop.f32.mrf.mxu0
    %v248 = vadd.f32 %v152, %v247
    %v249 = vpop.f32.mrf.mxu0
    %250 = vmatprep.mubr.bf16.mxu0 0
    %251 = vmatmul.mubr.bf16.gmra.mxu0 %v117
    %v252 = vpop.f32.mrf.mxu0
    %v253 = vadd.f32 %v152, %v252
    %v254 = vpop.f32.mrf.mxu0
    %v255 = vpop.f32.mrf.mxu0
    %v256 = vadd.f32 %v152, %v255
    %v257 = vpop.f32.mrf.mxu0
    %258 = vmatprep.mubr.bf16.mxu0 0
    %259 = vmatmul.mubr.bf16.gmra.mxu0 %v118
    %v260 = vpop.f32.mrf.mxu0
    %v261 = vadd.f32 %v152, %v260
    %v262 = vpop.f32.mrf.mxu0
    %v263 = vpop.f32.mrf.mxu0
    %v264 = vadd.f32 %v152, %v263
    %v265 = vpop.f32.mrf.mxu0
    %266 = vmatprep.mubr.bf16.mxu0 0
    %267 = vmatmul.mubr.bf16.gmra.mxu0 %v119
    %v268 = vpop.f32.mrf.mxu0
    %v269 = vadd.f32 %v152, %v268
    %v270 = vpop.f32.mrf.mxu0
    %v271 = vpop.f32.mrf.mxu0
    %v272 = vadd.f32 %v152, %v271
    %v273 = vpop.f32.mrf.mxu0
    %274 = vmatprep.mubr.bf16.mxu0 0
    %275 = vmatmul.mubr.bf16.gmra.mxu0 %v120
    %v276 = vpop.f32.mrf.mxu0
    %v277 = vadd.f32 %v152, %v276
    %v278 = vpop.f32.mrf.mxu0
    %v279 = vpop.f32.mrf.mxu0
    %v280 = vadd.f32 %v152, %v279
    %v281 = vpop.f32.mrf.mxu0
    %282 = vmatprep.mubr.bf16.mxu0 0
    %283 = vmatmul.mubr.bf16.gmra.mxu0 %v121
    %v284 = vpop.f32.mrf.mxu0
    %v285 = vadd.f32 %v152, %v284
    %v286 = vpop.f32.mrf.mxu0
    %v287 = vpop.f32.mrf.mxu0
    %v288 = vadd.f32 %v152, %v287
    %v289 = vpop.f32.mrf.mxu0
    %290 = vmatprep.mubr.bf16.mxu0 0
    %291 = vmatmul.mubr.bf16.gmra.mxu0 %v122
    %v292 = vpop.f32.mrf.mxu0
    %v293 = vadd.f32 %v152, %v292
    %v294 = vpop.f32.mrf.mxu0
    %v295 = vpop.f32.mrf.mxu0
    %v296 = vadd.f32 %v152, %v295
    %v297 = vpop.f32.mrf.mxu0
    %298 = vmatprep.mubr.bf16.mxu0 0
    %299 = vmatmul.mubr.bf16.gmra.mxu0 %v123
    %v300 = vpop.f32.mrf.mxu0
    %v301 = vadd.f32 %v152, %v300
    %v302 = vpop.f32.mrf.mxu0
    %v303 = vpop.f32.mrf.mxu0
    %v304 = vadd.f32 %v152, %v303
    %v305 = vpop.f32.mrf.mxu0
    %306 = vmatprep.mubr.bf16.mxu0 0
    %307 = vmatmul.mubr.bf16.gmra.mxu0 %v124
    %v308 = vpop.f32.mrf.mxu0
    %v309 = vadd.f32 %v152, %v308
    %v310 = vpop.f32.mrf.mxu0
    %v311 = vpop.f32.mrf.mxu0
    %v312 = vadd.f32 %v152, %v311
    %v313 = vpop.f32.mrf.mxu0
    %314 = vmatprep.mubr.bf16.mxu0 0
    %315 = vmatmul.mubr.bf16.gmra.mxu0 %v125
    %v316 = vpop.f32.mrf.mxu0
    %v317 = vadd.f32 %v152, %v316
    %v318 = vpop.f32.mrf.mxu0
    %v319 = vpop.f32.mrf.mxu0
    %v320 = vadd.f32 %v152, %v319
    %v321 = vpop.f32.mrf.mxu0
    %322 = vmatprep.mubr.bf16.mxu0 0
    %323 = vmatmul.mubr.bf16.gmra.mxu0 %v126
    %v324 = vpop.f32.mrf.mxu0
    %v325 = vadd.f32 %v152, %v324
    %v326 = vpop.f32.mrf.mxu0
    %v327 = vpop.f32.mrf.mxu0
    %v328 = vadd.f32 %v152, %v327
    %v329 = vpop.f32.mrf.mxu0
    %330 = vmatprep.mubr.bf16.mxu0 0
    %331 = vmatmul.mubr.bf16.gmra.mxu0 %v127
    %v332 = vpop.f32.mrf.mxu0
    %v333 = vadd.f32 %v152, %v332
    %v334 = vpop.f32.mrf.mxu0
    %v335 = vpop.f32.mrf.mxu0
    %v336 = vadd.f32 %v152, %v335
    %v337 = vpop.f32.mrf.mxu0
    %338 = vmatprep.mubr.bf16.mxu0 0
    %339 = vmatmul.mubr.bf16.gmra.mxu0 %v128
    %v340 = vpop.f32.mrf.mxu0
    %v341 = vadd.f32 %v152, %v340
    %v342 = vpop.f32.mrf.mxu0
    %v343 = vpop.f32.mrf.mxu0
    %v344 = vadd.f32 %v152, %v343
    %v345 = vpop.f32.mrf.mxu0
    %346 = vmatprep.mubr.bf16.mxu0 0
    %347 = vmatmul.mubr.bf16.gmra.mxu0 %v129
    %v348 = vpop.f32.mrf.mxu0
    %v349 = vadd.f32 %v152, %v348
    %v350 = vpop.f32.mrf.mxu0
    %v351 = vpop.f32.mrf.mxu0
    %v352 = vadd.f32 %v152, %v351
    %v353 = vpop.f32.mrf.mxu0
    %354 = vmatprep.mubr.bf16.mxu0 0
    %355 = vmatmul.mubr.bf16.gmra.mxu0 %v130
    %v356 = vpop.f32.mrf.mxu0
    %v357 = vadd.f32 %v152, %v356
    %v358 = vpop.f32.mrf.mxu0
    %v359 = vpop.f32.mrf.mxu0
    %v360 = vadd.f32 %v152, %v359
    %v361 = vpop.f32.mrf.mxu0
    %362 = vdwg.mxu0
    %v363 = vmax.f32 %v237, 0.0
    %v364 = vmax.f32 %v240, 0.0
    %v365 = vmax.f32 %v245, 0.0
    %v366 = vmax.f32 %v248, 0.0
    %v367 = vmax.f32 %v253, 0.0
    %v368 = vmax.f32 %v256, 0.0
    %v369 = vmax.f32 %v261, 0.0
    %v370 = vmax.f32 %v264, 0.0
    %v371 = vmax.f32 %v269, 0.0
    %v372 = vmax.f32 %v272, 0.0
    %v373 = vmax.f32 %v277, 0.0
    %v374 = vmax.f32 %v280, 0.0
    %v375 = vmax.f32 %v285, 0.0
    %v376 = vmax.f32 %v288, 0.0
    %v377 = vmax.f32 %v293, 0.0
    %v378 = vmax.f32 %v296, 0.0
    %v379 = vmax.f32 %v301, 0.0
    %v380 = vmax.f32 %v304, 0.0
    %v381 = vmax.f32 %v309, 0.0
    %v382 = vmax.f32 %v312, 0.0
    %v383 = vmax.f32 %v317, 0.0
    %v384 = vmax.f32 %v320, 0.0
    %v385 = vmax.f32 %v325, 0.0
    %v386 = vmax.f32 %v328, 0.0
    %v387 = vmax.f32 %v333, 0.0
    %v388 = vmax.f32 %v336, 0.0
    %v389 = vmax.f32 %v341, 0.0
    %v390 = vmax.f32 %v344, 0.0
    %v391 = vmax.f32 %v349, 0.0
    %v392 = vmax.f32 %v352, 0.0
    %v393 = vmax.f32 %v357, 0.0
    %v394 = vmax.f32 %v360, 0.0
    %v395 = vld [vmem:[#allocation7] sm:$0xf]
    %v396 = vld [vmem:[#allocation7 + $0x4] sm:$0xf]
    %v397 = vld [vmem:[#allocation7 + $0x8] sm:$0xf]
    %v398 = vld [vmem:[#allocation7 + $0xc] sm:$0xf]
    %v399 = vld [vmem:[#allocation7 + $0x10] sm:$0xf]
    %v400 = vld [vmem:[#allocation7 + $0x14] sm:$0xf]
    %v401 = vld [vmem:[#allocation7 + $0x18] sm:$0xf]
    %v402 = vld [vmem:[#allocation7 + $0x1c] sm:$0xf]
    %v403 = vld [vmem:[#allocation7 + $0x20] sm:$0xf]
    %v404 = vld [vmem:[#allocation7 + $0x24] sm:$0xf]
    %v405 = vld [vmem:[#allocation7 + $0x28] sm:$0xf]
    %v406 = vld [vmem:[#allocation7 + $0x2c] sm:$0xf]
    %v407 = vld [vmem:[#allocation7 + $0x30] sm:$0xf]
    %v408 = vld [vmem:[#allocation7 + $0x34] sm:$0xf]
    %v409 = vld [vmem:[#allocation7 + $0x38] sm:$0xf]
    %v410 = vld [vmem:[#allocation7 + $0x3c] sm:$0xf]
    %v411 = vld [vmem:[%s4] sm:$0x1]
    %v413 = vlaneseq
    %v414 = vshrl.u32 %v413, 7
    %v415 = vsub.s32 0, %v414
    %v416 = vrot.slane %v411, %v415
    %v434 = vunpack.c.l.b16 %v395
    %v435 = vunpack.c.l.b16 %v396
    %v436 = vunpack.c.l.b16 %v397
    %v437 = vunpack.c.l.b16 %v398
    %v438 = vunpack.c.l.b16 %v399
    %v439 = vunpack.c.l.b16 %v400
    %v440 = vunpack.c.l.b16 %v401
    %v441 = vunpack.c.l.b16 %v402
    %v442 = vunpack.c.l.b16 %v403
    %v443 = vunpack.c.l.b16 %v404
    %v444 = vunpack.c.l.b16 %v405
    %v445 = vunpack.c.l.b16 %v406
    %v446 = vunpack.c.l.b16 %v407
    %v447 = vunpack.c.l.b16 %v408
    %v448 = vunpack.c.l.b16 %v409
    %v449 = vunpack.c.l.b16 %v410
    %v450 = vpack.c.b16 %v435, %v434
    %v451 = vpack.c.b16 %v437, %v436
    %v452 = vpack.c.b16 %v439, %v438
    %v453 = vpack.c.b16 %v441, %v440
    %v454 = vpack.c.b16 %v443, %v442
    %v455 = vpack.c.b16 %v445, %v444
    %v456 = vpack.c.b16 %v447, %v446
    %v457 = vpack.c.b16 %v449, %v448
    %466 = vmatprep.subr.bf16.mxu0 0
    %467 = vmatpush1.bf16.msra.mxu0 %v457
    %468 = vmatprep.subr.bf16.mxu0 0
    %469 = vmatpush1.bf16.msra.mxu0 %v456
    %470 = vmatprep.subr.bf16.mxu0 0
    %471 = vmatpush1.bf16.msra.mxu0 %v455
    %472 = vmatprep.subr.bf16.mxu0 0
    %473 = vmatpush1.bf16.msra.mxu0 %v454
    %474 = vmatprep.subr.bf16.mxu0 0
    %475 = vmatpush1.bf16.msra.mxu0 %v453
    %476 = vmatprep.subr.bf16.mxu0 0
    %477 = vmatpush1.bf16.msra.mxu0 %v452
    %478 = vmatprep.subr.bf16.mxu0 0
    %479 = vmatpush1.bf16.msra.mxu0 %v451
    %480 = vmatprep.subr.bf16.mxu0 0
    %481 = vmatpush1.bf16.msra.mxu0 %v450
    %482 = vmatprep.subr.bf16.mxu0 0
    %483 = vmatpush2.bf16.msra.mxu0 0
    %484 = vmatprep.subr.bf16.mxu0 0
    %485 = vmatpush2.bf16.msra.mxu0 0
    %486 = vmatprep.subr.bf16.mxu0 0
    %487 = vmatpush2.bf16.msra.mxu0 0
    %488 = vmatprep.subr.bf16.mxu0 0
    %489 = vmatpush2.bf16.msra.mxu0 0
    %490 = vmatprep.subr.bf16.mxu0 0
    %491 = vmatpush2.bf16.msra.mxu0 0
    %492 = vmatprep.subr.bf16.mxu0 0
    %493 = vmatpush2.bf16.msra.mxu0 0
    %494 = vmatprep.subr.bf16.mxu0 0
    %495 = vmatpush2.bf16.msra.mxu0 0
    %496 = vmatprep.subr.bf16.mxu0 0
    %497 = vmatpush2.bf16.msra.mxu0 0
    %498 = vmatprep.mubr.bf16.mxu0 0
    %499 = vmatmul.mubr.bf16.gmra.mxu0 %v115
    %v500 = vpop.f32.mrf.mxu0
    %v501 = vadd.f32 %v416, %v500
    %v502 = vpop.f32.mrf.mxu0
    %v503 = vpop.f32.mrf.mxu0
    %v504 = vadd.f32 %v416, %v503
    %v505 = vpop.f32.mrf.mxu0
    %506 = vmatprep.mubr.bf16.mxu0 0
    %507 = vmatmul.mubr.bf16.gmra.mxu0 %v116
    %v508 = vpop.f32.mrf.mxu0
    %v509 = vadd.f32 %v416, %v508
    %v510 = vpop.f32.mrf.mxu0
    %v511 = vpop.f32.mrf.mxu0
    %v512 = vadd.f32 %v416, %v511
    %v513 = vpop.f32.mrf.mxu0
    %514 = vmatprep.mubr.bf16.mxu0 0
    %515 = vmatmul.mubr.bf16.gmra.mxu0 %v117
    %v516 = vpop.f32.mrf.mxu0
    %v517 = vadd.f32 %v416, %v516
    %v518 = vpop.f32.mrf.mxu0
    %v519 = vpop.f32.mrf.mxu0
    %v520 = vadd.f32 %v416, %v519
    %v521 = vpop.f32.mrf.mxu0
    %522 = vmatprep.mubr.bf16.mxu0 0
    %523 = vmatmul.mubr.bf16.gmra.mxu0 %v118
    %v524 = vpop.f32.mrf.mxu0
    %v525 = vadd.f32 %v416, %v524
    %v526 = vpop.f32.mrf.mxu0
    %v527 = vpop.f32.mrf.mxu0
    %v528 = vadd.f32 %v416, %v527
    %v529 = vpop.f32.mrf.mxu0
    %530 = vmatprep.mubr.bf16.mxu0 0
    %531 = vmatmul.mubr.bf16.gmra.mxu0 %v119
    %v532 = vpop.f32.mrf.mxu0
    %v533 = vadd.f32 %v416, %v532
    %v534 = vpop.f32.mrf.mxu0
    %v535 = vpop.f32.mrf.mxu0
    %v536 = vadd.f32 %v416, %v535
    %v537 = vpop.f32.mrf.mxu0
    %538 = vmatprep.mubr.bf16.mxu0 0
    %539 = vmatmul.mubr.bf16.gmra.mxu0 %v120
    %v540 = vpop.f32.mrf.mxu0
    %v541 = vadd.f32 %v416, %v540
    %v542 = vpop.f32.mrf.mxu0
    %v543 = vpop.f32.mrf.mxu0
    %v544 = vadd.f32 %v416, %v543
    %v545 = vpop.f32.mrf.mxu0
    %546 = vmatprep.mubr.bf16.mxu0 0
    %547 = vmatmul.mubr.bf16.gmra.mxu0 %v121
    %v548 = vpop.f32.mrf.mxu0
    %v549 = vadd.f32 %v416, %v548
    %v550 = vpop.f32.mrf.mxu0
    %v551 = vpop.f32.mrf.mxu0
    %v552 = vadd.f32 %v416, %v551
    %v553 = vpop.f32.mrf.mxu0
    %554 = vmatprep.mubr.bf16.mxu0 0
    %555 = vmatmul.mubr.bf16.gmra.mxu0 %v122
    %v556 = vpop.f32.mrf.mxu0
    %v557 = vadd.f32 %v416, %v556
    %v558 = vpop.f32.mrf.mxu0
    %v559 = vpop.f32.mrf.mxu0
    %v560 = vadd.f32 %v416, %v559
    %v561 = vpop.f32.mrf.mxu0
    %562 = vmatprep.mubr.bf16.mxu0 0
    %563 = vmatmul.mubr.bf16.gmra.mxu0 %v123
    %v564 = vpop.f32.mrf.mxu0
    %v565 = vadd.f32 %v416, %v564
    %v566 = vpop.f32.mrf.mxu0
    %v567 = vpop.f32.mrf.mxu0
    %v568 = vadd.f32 %v416, %v567
    %v569 = vpop.f32.mrf.mxu0
    %570 = vmatprep.mubr.bf16.mxu0 0
    %571 = vmatmul.mubr.bf16.gmra.mxu0 %v124
    %v572 = vpop.f32.mrf.mxu0
    %v573 = vadd.f32 %v416, %v572
    %v574 = vpop.f32.mrf.mxu0
    %v575 = vpop.f32.mrf.mxu0
    %v576 = vadd.f32 %v416, %v575
    %v577 = vpop.f32.mrf.mxu0
    %578 = vmatprep.mubr.bf16.mxu0 0
    %579 = vmatmul.mubr.bf16.gmra.mxu0 %v125
    %v580 = vpop.f32.mrf.mxu0
    %v581 = vadd.f32 %v416, %v580
    %v582 = vpop.f32.mrf.mxu0
    %v583 = vpop.f32.mrf.mxu0
    %v584 = vadd.f32 %v416, %v583
    %v585 = vpop.f32.mrf.mxu0
    %586 = vmatprep.mubr.bf16.mxu0 0
    %587 = vmatmul.mubr.bf16.gmra.mxu0 %v126
    %v588 = vpop.f32.mrf.mxu0
    %v589 = vadd.f32 %v416, %v588
    %v590 = vpop.f32.mrf.mxu0
    %v591 = vpop.f32.mrf.mxu0
    %v592 = vadd.f32 %v416, %v591
    %v593 = vpop.f32.mrf.mxu0
    %594 = vmatprep.mubr.bf16.mxu0 0
    %595 = vmatmul.mubr.bf16.gmra.mxu0 %v127
    %v596 = vpop.f32.mrf.mxu0
    %v597 = vadd.f32 %v416, %v596
    %v598 = vpop.f32.mrf.mxu0
    %v599 = vpop.f32.mrf.mxu0
    %v600 = vadd.f32 %v416, %v599
    %v601 = vpop.f32.mrf.mxu0
    %602 = vmatprep.mubr.bf16.mxu0 0
    %603 = vmatmul.mubr.bf16.gmra.mxu0 %v128
    %v604 = vpop.f32.mrf.mxu0
    %v605 = vadd.f32 %v416, %v604
    %v606 = vpop.f32.mrf.mxu0
    %v607 = vpop.f32.mrf.mxu0
    %v608 = vadd.f32 %v416, %v607
    %v609 = vpop.f32.mrf.mxu0
    %610 = vmatprep.mubr.bf16.mxu0 0
    %611 = vmatmul.mubr.bf16.gmra.mxu0 %v129
    %v612 = vpop.f32.mrf.mxu0
    %v613 = vadd.f32 %v416, %v612
    %v614 = vpop.f32.mrf.mxu0
    %v615 = vpop.f32.mrf.mxu0
    %v616 = vadd.f32 %v416, %v615
    %v617 = vpop.f32.mrf.mxu0
    %618 = vmatprep.mubr.bf16.mxu0 0
    %619 = vmatmul.mubr.bf16.gmra.mxu0 %v130
    %v620 = vpop.f32.mrf.mxu0
    %v621 = vadd.f32 %v416, %v620
    %v622 = vpop.f32.mrf.mxu0
    %v623 = vpop.f32.mrf.mxu0
    %v624 = vadd.f32 %v416, %v623
    %v625 = vpop.f32.mrf.mxu0
    %626 = vdwg.mxu0
    %v627 = vmax.f32 %v501, 0.0
    %v628 = vmax.f32 %v504, 0.0
    %v629 = vmax.f32 %v509, 0.0
    %v630 = vmax.f32 %v512, 0.0
    %v631 = vmax.f32 %v517, 0.0
    %v632 = vmax.f32 %v520, 0.0
    %v633 = vmax.f32 %v525, 0.0
    %v634 = vmax.f32 %v528, 0.0
    %v635 = vmax.f32 %v533, 0.0
    %v636 = vmax.f32 %v536, 0.0
    %v637 = vmax.f32 %v541, 0.0
    %v638 = vmax.f32 %v544, 0.0
    %v639 = vmax.f32 %v549, 0.0
    %v640 = vmax.f32 %v552, 0.0
    %v641 = vmax.f32 %v557, 0.0
    %v642 = vmax.f32 %v560, 0.0
    %v643 = vmax.f32 %v565, 0.0
    %v644 = vmax.f32 %v568, 0.0
    %v645 = vmax.f32 %v573, 0.0
    %v646 = vmax.f32 %v576, 0.0
    %v647 = vmax.f32 %v581, 0.0
    %v648 = vmax.f32 %v584, 0.0
    %v649 = vmax.f32 %v589, 0.0
    %v650 = vmax.f32 %v592, 0.0
    %v651 = vmax.f32 %v597, 0.0
    %v652 = vmax.f32 %v600, 0.0
    %v653 = vmax.f32 %v605, 0.0
    %v654 = vmax.f32 %v608, 0.0
    %v655 = vmax.f32 %v613, 0.0
    %v656 = vmax.f32 %v616, 0.0
    %v657 = vmax.f32 %v621, 0.0
    %v658 = vmax.f32 %v624, 0.0
    %v659 = vmul.f32 %v627, %v627
    %v660 = vmul.f32 %v628, %v628
    %v661 = vmul.f32 %v629, %v629
    %v662 = vmul.f32 %v630, %v630
    %v663 = vmul.f32 %v631, %v631
    %v664 = vmul.f32 %v632, %v632
    %v665 = vmul.f32 %v633, %v633
    %v666 = vmul.f32 %v634, %v634
    %v667 = vmul.f32 %v635, %v635
    %v668 = vmul.f32 %v636, %v636
    %v669 = vmul.f32 %v637, %v637
    %v670 = vmul.f32 %v638, %v638
    %v671 = vmul.f32 %v639, %v639
    %v672 = vmul.f32 %v640, %v640
    %v673 = vmul.f32 %v641, %v641
    %v674 = vmul.f32 %v642, %v642
    %v675 = vmul.f32 %v643, %v643
    %v676 = vmul.f32 %v644, %v644
    %v677 = vmul.f32 %v645, %v645
    %v678 = vmul.f32 %v646, %v646
    %v679 = vmul.f32 %v647, %v647
    %v680 = vmul.f32 %v648, %v648
    %v681 = vmul.f32 %v649, %v649
    %v682 = vmul.f32 %v650, %v650
    %v683 = vmul.f32 %v651, %v651
    %v684 = vmul.f32 %v652, %v652
    %v685 = vmul.f32 %v653, %v653
    %v686 = vmul.f32 %v654, %v654
    %v687 = vmul.f32 %v655, %v655
    %v688 = vmul.f32 %v656, %v656
    %v689 = vmul.f32 %v657, %v657
    %v690 = vmul.f32 %v658, %v658
    %691 = vadd.xlane.f32.xlu0 %v659
    %v692 = vpop.xlane.xlu0 %691
    %693 = vadd.xlane.f32.xlu0 %v660
    %v694 = vpop.xlane.xlu0 %693
    %695 = vadd.xlane.f32.xlu0 %v661
    %v696 = vpop.xlane.xlu0 %695
    %697 = vadd.xlane.f32.xlu0 %v662
    %v698 = vpop.xlane.xlu0 %697
    %699 = vadd.xlane.f32.xlu0 %v663
    %v700 = vpop.xlane.xlu0 %699
    %701 = vadd.xlane.f32.xlu0 %v664
    %v702 = vpop.xlane.xlu0 %701
    %703 = vadd.xlane.f32.xlu0 %v665
    %v704 = vpop.xlane.xlu0 %703
    %705 = vadd.xlane.f32.xlu0 %v666
    %v706 = vpop.xlane.xlu0 %705
    %707 = vadd.xlane.f32.xlu0 %v667
    %v708 = vpop.xlane.xlu0 %707
    %709 = vadd.xlane.f32.xlu0 %v668
    %v710 = vpop.xlane.xlu0 %709
    %711 = vadd.xlane.f32.xlu0 %v669
    %v712 = vpop.xlane.xlu0 %711
    %713 = vadd.xlane.f32.xlu0 %v670
    %v714 = vpop.xlane.xlu0 %713
    %715 = vadd.xlane.f32.xlu0 %v671
    %v716 = vpop.xlane.xlu0 %715
    %717 = vadd.xlane.f32.xlu0 %v672
    %v718 = vpop.xlane.xlu0 %717
    %719 = vadd.xlane.f32.xlu0 %v673
    %v720 = vpop.xlane.xlu0 %719
    %721 = vadd.xlane.f32.xlu0 %v674
    %v722 = vpop.xlane.xlu0 %721
    %723 = vadd.xlane.f32.xlu0 %v675
    %v724 = vpop.xlane.xlu0 %723
    %725 = vadd.xlane.f32.xlu0 %v676
    %v726 = vpop.xlane.xlu0 %725
    %727 = vadd.xlane.f32.xlu0 %v677
    %v728 = vpop.xlane.xlu0 %727
    %729 = vadd.xlane.f32.xlu0 %v678
    %v730 = vpop.xlane.xlu0 %729
    %731 = vadd.xlane.f32.xlu0 %v679
    %v732 = vpop.xlane.xlu0 %731
    %733 = vadd.xlane.f32.xlu0 %v680
    %v734 = vpop.xlane.xlu0 %733
    %735 = vadd.xlane.f32.xlu0 %v681
    %v736 = vpop.xlane.xlu0 %735
    %737 = vadd.xlane.f32.xlu0 %v682
    %v738 = vpop.xlane.xlu0 %737
    %739 = vadd.xlane.f32.xlu0 %v683
    %v740 = vpop.xlane.xlu0 %739
    %741 = vadd.xlane.f32.xlu0 %v684
    %v742 = vpop.xlane.xlu0 %741
    %743 = vadd.xlane.f32.xlu0 %v685
    %v744 = vpop.xlane.xlu0 %743
    %745 = vadd.xlane.f32.xlu0 %v686
    %v746 = vpop.xlane.xlu0 %745
    %747 = vadd.xlane.f32.xlu0 %v687
    %v748 = vpop.xlane.xlu0 %747
    %749 = vadd.xlane.f32.xlu0 %v688
    %v750 = vpop.xlane.xlu0 %749
    %751 = vadd.xlane.f32.xlu0 %v689
    %v752 = vpop.xlane.xlu0 %751
    %753 = vadd.xlane.f32.xlu0 %v690
    %v754 = vpop.xlane.xlu0 %753
    %v755 = vadd.f32 %v692, 1e-12
    %v756 = vadd.f32 %v694, 1e-12
    %v757 = vadd.f32 %v696, 1e-12
    %v758 = vadd.f32 %v698, 1e-12
    %v759 = vadd.f32 %v700, 1e-12
    %v760 = vadd.f32 %v702, 1e-12
    %v761 = vadd.f32 %v704, 1e-12
    %v762 = vadd.f32 %v706, 1e-12
    %v763 = vadd.f32 %v708, 1e-12
    %v764 = vadd.f32 %v710, 1e-12
    %v765 = vadd.f32 %v712, 1e-12
    %v766 = vadd.f32 %v714, 1e-12
    %v767 = vadd.f32 %v716, 1e-12
    %v768 = vadd.f32 %v718, 1e-12
    %v769 = vadd.f32 %v720, 1e-12
    %v770 = vadd.f32 %v722, 1e-12
    %v771 = vadd.f32 %v724, 1e-12
    %v772 = vadd.f32 %v726, 1e-12
    %v773 = vadd.f32 %v728, 1e-12
    %v774 = vadd.f32 %v730, 1e-12
    %v775 = vadd.f32 %v732, 1e-12
    %v776 = vadd.f32 %v734, 1e-12
    %v777 = vadd.f32 %v736, 1e-12
    %v778 = vadd.f32 %v738, 1e-12
    %v779 = vadd.f32 %v740, 1e-12
    %v780 = vadd.f32 %v742, 1e-12
    %v781 = vadd.f32 %v744, 1e-12
    %v782 = vadd.f32 %v746, 1e-12
    %v783 = vadd.f32 %v748, 1e-12
    %v784 = vadd.f32 %v750, 1e-12
    %v785 = vadd.f32 %v752, 1e-12
    %v786 = vadd.f32 %v754, 1e-12
    %v787 = vrsqrt.pop %v755
    %v788 = vrsqrt.pop %v756
    %v789 = vrsqrt.pop %v757
    %v790 = vrsqrt.pop %v758
    %v791 = vrsqrt.pop %v759
    %v792 = vrsqrt.pop %v760
    %v793 = vrsqrt.pop %v761
    %v794 = vrsqrt.pop %v762
    %v795 = vrsqrt.pop %v763
    %v796 = vrsqrt.pop %v764
    %v797 = vrsqrt.pop %v765
    %v798 = vrsqrt.pop %v766
    %v799 = vrsqrt.pop %v767
    %v800 = vrsqrt.pop %v768
    %v801 = vrsqrt.pop %v769
    %v802 = vrsqrt.pop %v770
    %v803 = vrsqrt.pop %v771
    %v804 = vrsqrt.pop %v772
    %v805 = vrsqrt.pop %v773
    %v806 = vrsqrt.pop %v774
    %v807 = vrsqrt.pop %v775
    %v808 = vrsqrt.pop %v776
    %v809 = vrsqrt.pop %v777
    %v810 = vrsqrt.pop %v778
    %v811 = vrsqrt.pop %v779
    %v812 = vrsqrt.pop %v780
    %v813 = vrsqrt.pop %v781
    %v814 = vrsqrt.pop %v782
    %v815 = vrsqrt.pop %v783
    %v816 = vrsqrt.pop %v784
    %v817 = vrsqrt.pop %v785
    %v818 = vrsqrt.pop %v786
    %v819 = vmul.f32 %v627, %v787
    %v820 = vmul.f32 %v628, %v788
    %v821 = vmul.f32 %v629, %v789
    %v822 = vmul.f32 %v630, %v790
    %v823 = vmul.f32 %v631, %v791
    %v824 = vmul.f32 %v632, %v792
    %v825 = vmul.f32 %v633, %v793
    %v826 = vmul.f32 %v634, %v794
    %v827 = vmul.f32 %v635, %v795
    %v828 = vmul.f32 %v636, %v796
    %v829 = vmul.f32 %v637, %v797
    %v830 = vmul.f32 %v638, %v798
    %v831 = vmul.f32 %v639, %v799
    %v832 = vmul.f32 %v640, %v800
    %v833 = vmul.f32 %v641, %v801
    %v834 = vmul.f32 %v642, %v802
    %v835 = vmul.f32 %v643, %v803
    %v836 = vmul.f32 %v644, %v804
    %v837 = vmul.f32 %v645, %v805
    %v838 = vmul.f32 %v646, %v806
    %v839 = vmul.f32 %v647, %v807
    %v840 = vmul.f32 %v648, %v808
    %v841 = vmul.f32 %v649, %v809
    %v842 = vmul.f32 %v650, %v810
    %v843 = vmul.f32 %v651, %v811
    %v844 = vmul.f32 %v652, %v812
    %v845 = vmul.f32 %v653, %v813
    %v846 = vmul.f32 %v654, %v814
    %v847 = vmul.f32 %v655, %v815
    %v848 = vmul.f32 %v656, %v816
    %v849 = vmul.f32 %v657, %v817
    %v850 = vmul.f32 %v658, %v818
    %v851 = vpack.c.bf16 %v820, %v819
    %v852 = vpack.c.bf16 %v822, %v821
    %v853 = vpack.c.bf16 %v824, %v823
    %v854 = vpack.c.bf16 %v826, %v825
    %v855 = vpack.c.bf16 %v828, %v827
    %v856 = vpack.c.bf16 %v830, %v829
    %v857 = vpack.c.bf16 %v832, %v831
    %v858 = vpack.c.bf16 %v834, %v833
    %v859 = vpack.c.bf16 %v836, %v835
    %v860 = vpack.c.bf16 %v838, %v837
    %v861 = vpack.c.bf16 %v840, %v839
    %v862 = vpack.c.bf16 %v842, %v841
    %v863 = vpack.c.bf16 %v844, %v843
    %v864 = vpack.c.bf16 %v846, %v845
    %v865 = vpack.c.bf16 %v848, %v847
    %v866 = vpack.c.bf16 %v850, %v849
    %867 = vmatprep.subr.bf16.mxu0 0
    %868 = vmatpush1.bf16.xpose.msra.mxu0 0
    %869 = vmatprep.subr.bf16.mxu0 0
    %870 = vmatpush1.bf16.xpose.msra.mxu0 0
    %871 = vmatprep.subr.bf16.mxu0 0
    %872 = vmatpush1.bf16.xpose.msra.mxu0 0
    %873 = vmatprep.subr.bf16.mxu0 0
    %874 = vmatpush1.bf16.xpose.msra.mxu0 0
    %875 = vmatprep.subr.bf16.mxu0 0
    %876 = vmatpush1.bf16.xpose.msra.mxu0 %v854
    %877 = vmatprep.subr.bf16.mxu0 0
    %878 = vmatpush1.bf16.xpose.msra.mxu0 %v853
    %879 = vmatprep.subr.bf16.mxu0 0
    %880 = vmatpush1.bf16.xpose.msra.mxu0 %v852
    %881 = vmatprep.subr.bf16.mxu0 0
    %882 = vmatpush1.bf16.xpose.msra.mxu0 %v851
    %883 = vmatprep.subr.bf16.mxu0 0
    %884 = vmatpush2.bf16.xpose.msra.mxu0 0
    %885 = vmatprep.subr.bf16.mxu0 0
    %886 = vmatpush2.bf16.xpose.msra.mxu0 0
    %887 = vmatprep.subr.bf16.mxu0 0
    %888 = vmatpush2.bf16.xpose.msra.mxu0 0
    %889 = vmatprep.subr.bf16.mxu0 0
    %890 = vmatpush2.bf16.xpose.msra.mxu0 0
    %891 = vmatprep.subr.bf16.mxu0 0
    %892 = vmatpush2.bf16.xpose.msra.mxu0 0
    %893 = vmatprep.subr.bf16.mxu0 0
    %894 = vmatpush2.bf16.xpose.msra.mxu0 0
    %895 = vmatprep.subr.bf16.mxu0 0
    %896 = vmatpush2.bf16.xpose.msra.mxu0 0
    %897 = vmatprep.subr.bf16.mxu0 0
    %898 = vmatpush2.bf16.xpose.msra.mxu0 0
    %899 = vmatprep.mubr.bf16.mxu0 0
    %900 = vmatmul.mubr.bf16.gmra.mxu0 %v851
    %v901 = vpop.f32.mrf.mxu0
    %v902 = vadd.f32 0.0, %v901
    %v903 = vpop.f32.mrf.mxu0
    %v904 = vpop.f32.mrf.mxu0
    %v905 = vadd.f32 0.0, %v904
    %v906 = vpop.f32.mrf.mxu0
    %907 = vmatprep.mubr.bf16.mxu0 0
    %908 = vmatmul.mubr.bf16.gmra.mxu0 %v852
    %v909 = vpop.f32.mrf.mxu0
    %v910 = vadd.f32 0.0, %v909
    %v911 = vpop.f32.mrf.mxu0
    %v912 = vpop.f32.mrf.mxu0
    %v913 = vadd.f32 0.0, %v912
    %v914 = vpop.f32.mrf.mxu0
    %915 = vmatprep.mubr.bf16.mxu0 0
    %916 = vmatmul.mubr.bf16.gmra.mxu0 %v853
    %v917 = vpop.f32.mrf.mxu0
    %v918 = vadd.f32 0.0, %v917
    %v919 = vpop.f32.mrf.mxu0
    %v920 = vpop.f32.mrf.mxu0
    %v921 = vadd.f32 0.0, %v920
    %v922 = vpop.f32.mrf.mxu0
    %923 = vmatprep.mubr.bf16.mxu0 0
    %924 = vmatmul.mubr.bf16.gmra.mxu0 %v854
    %v925 = vpop.f32.mrf.mxu0
    %v926 = vadd.f32 0.0, %v925
    %v927 = vpop.f32.mrf.mxu0
    %v928 = vpop.f32.mrf.mxu0
    %v929 = vadd.f32 0.0, %v928
    %v930 = vpop.f32.mrf.mxu0
    %931 = vdwg.mxu0
    %932 = vmatprep.subr.bf16.mxu0 0
    %933 = vmatpush1.bf16.xpose.msra.mxu0 0
    %934 = vmatprep.subr.bf16.mxu0 0
    %935 = vmatpush1.bf16.xpose.msra.mxu0 0
    %936 = vmatprep.subr.bf16.mxu0 0
    %937 = vmatpush1.bf16.xpose.msra.mxu0 0
    %938 = vmatprep.subr.bf16.mxu0 0
    %939 = vmatpush1.bf16.xpose.msra.mxu0 0
    %940 = vmatprep.subr.bf16.mxu0 0
    %941 = vmatpush1.bf16.xpose.msra.mxu0 %v858
    %942 = vmatprep.subr.bf16.mxu0 0
    %943 = vmatpush1.bf16.xpose.msra.mxu0 %v857
    %944 = vmatprep.subr.bf16.mxu0 0
    %945 = vmatpush1.bf16.xpose.msra.mxu0 %v856
    %946 = vmatprep.subr.bf16.mxu0 0
    %947 = vmatpush1.bf16.xpose.msra.mxu0 %v855
    %948 = vmatprep.subr.bf16.mxu0 0
    %949 = vmatpush2.bf16.xpose.msra.mxu0 0
    %950 = vmatprep.subr.bf16.mxu0 0
    %951 = vmatpush2.bf16.xpose.msra.mxu0 0
    %952 = vmatprep.subr.bf16.mxu0 0
    %953 = vmatpush2.bf16.xpose.msra.mxu0 0
    %954 = vmatprep.subr.bf16.mxu0 0
    %955 = vmatpush2.bf16.xpose.msra.mxu0 0
    %956 = vmatprep.subr.bf16.mxu0 0
    %957 = vmatpush2.bf16.xpose.msra.mxu0 0
    %958 = vmatprep.subr.bf16.mxu0 0
    %959 = vmatpush2.bf16.xpose.msra.mxu0 0
    %960 = vmatprep.subr.bf16.mxu0 0
    %961 = vmatpush2.bf16.xpose.msra.mxu0 0
    %962 = vmatprep.subr.bf16.mxu0 0
    %963 = vmatpush2.bf16.xpose.msra.mxu0 0
    %964 = vmatprep.mubr.bf16.mxu0 0
    %965 = vmatmul.mubr.bf16.gmra.mxu0 %v855
    %v966 = vpop.f32.mrf.mxu0
    %v967 = vadd.f32 0.0, %v966
    %v968 = vpop.f32.mrf.mxu0
    %v969 = vpop.f32.mrf.mxu0
    %v970 = vadd.f32 0.0, %v969
    %v971 = vpop.f32.mrf.mxu0
    %972 = vmatprep.mubr.bf16.mxu0 0
    %973 = vmatmul.mubr.bf16.gmra.mxu0 %v856
    %v974 = vpop.f32.mrf.mxu0
    %v975 = vadd.f32 0.0, %v974
    %v976 = vpop.f32.mrf.mxu0
    %v977 = vpop.f32.mrf.mxu0
    %v978 = vadd.f32 0.0, %v977
    %v979 = vpop.f32.mrf.mxu0
    %980 = vmatprep.mubr.bf16.mxu0 0
    %981 = vmatmul.mubr.bf16.gmra.mxu0 %v857
    %v982 = vpop.f32.mrf.mxu0
    %v983 = vadd.f32 0.0, %v982
    %v984 = vpop.f32.mrf.mxu0
    %v985 = vpop.f32.mrf.mxu0
    %v986 = vadd.f32 0.0, %v985
    %v987 = vpop.f32.mrf.mxu0
    %988 = vmatprep.mubr.bf16.mxu0 0
    %989 = vmatmul.mubr.bf16.gmra.mxu0 %v858
    %v990 = vpop.f32.mrf.mxu0
    %v991 = vadd.f32 0.0, %v990
    %v992 = vpop.f32.mrf.mxu0
    %v993 = vpop.f32.mrf.mxu0
    %v994 = vadd.f32 0.0, %v993
    %v995 = vpop.f32.mrf.mxu0
    %996 = vdwg.mxu0
    %997 = vmatprep.subr.bf16.mxu0 0
    %998 = vmatpush1.bf16.xpose.msra.mxu0 0
    %999 = vmatprep.subr.bf16.mxu0 0
    %1000 = vmatpush1.bf16.xpose.msra.mxu0 0
    %1001 = vmatprep.subr.bf16.mxu0 0
    %1002 = vmatpush1.bf16.xpose.msra.mxu0 0
    %1003 = vmatprep.subr.bf16.mxu0 0
    %1004 = vmatpush1.bf16.xpose.msra.mxu0 0
    %1005 = vmatprep.subr.bf16.mxu0 0
    %1006 = vmatpush1.bf16.xpose.msra.mxu0 %v862
    %1007 = vmatprep.subr.bf16.mxu0 0
    %1008 = vmatpush1.bf16.xpose.msra.mxu0 %v861
    %1009 = vmatprep.subr.bf16.mxu0 0
    %1010 = vmatpush1.bf16.xpose.msra.mxu0 %v860
    %1011 = vmatprep.subr.bf16.mxu0 0
    %1012 = vmatpush1.bf16.xpose.msra.mxu0 %v859
    %1013 = vmatprep.subr.bf16.mxu0 0
    %1014 = vmatpush2.bf16.xpose.msra.mxu0 0
    %1015 = vmatprep.subr.bf16.mxu0 0
    %1016 = vmatpush2.bf16.xpose.msra.mxu0 0
    %1017 = vmatprep.subr.bf16.mxu0 0
    %1018 = vmatpush2.bf16.xpose.msra.mxu0 0
    %1019 = vmatprep.subr.bf16.mxu0 0
    %1020 = vmatpush2.bf16.xpose.msra.mxu0 0
    %1021 = vmatprep.subr.bf16.mxu0 0
    %1022 = vmatpush2.bf16.xpose.msra.mxu0 0
    %1023 = vmatprep.subr.bf16.mxu0 0
    %1024 = vmatpush2.bf16.xpose.msra.mxu0 0
    %1025 = vmatprep.subr.bf16.mxu0 0
    %1026 = vmatpush2.bf16.xpose.msra.mxu0 0
    %1027 = vmatprep.subr.bf16.mxu0 0
    %1028 = vmatpush2.bf16.xpose.msra.mxu0 0
    %1029 = vmatprep.mubr.bf16.mxu0 0
    %1030 = vmatmul.mubr.bf16.gmra.mxu0 %v859
    %v1031 = vpop.f32.mrf.mxu0
    %v1032 = vadd.f32 0.0, %v1031
    %v1033 = vpop.f32.mrf.mxu0
    %v1034 = vpop.f32.mrf.mxu0
    %v1035 = vadd.f32 0.0, %v1034
    %v1036 = vpop.f32.mrf.mxu0
    %1037 = vmatprep.mubr.bf16.mxu0 0
    %1038 = vmatmul.mubr.bf16.gmra.mxu0 %v860
    %v1039 = vpop.f32.mrf.mxu0
    %v1040 = vadd.f32 0.0, %v1039
    %v1041 = vpop.f32.mrf.mxu0
    %v1042 = vpop.f32.mrf.mxu0
    %v1043 = vadd.f32 0.0, %v1042
    %v1044 = vpop.f32.mrf.mxu0
    %1045 = vmatprep.mubr.bf16.mxu0 0
    %1046 = vmatmul.mubr.bf16.gmra.mxu0 %v861
    %v1047 = vpop.f32.mrf.mxu0
    %v1048 = vadd.f32 0.0, %v1047
    %v1049 = vpop.f32.mrf.mxu0
    %v1050 = vpop.f32.mrf.mxu0
    %v1051 = vadd.f32 0.0, %v1050
    %v1052 = vpop.f32.mrf.mxu0
    %1053 = vmatprep.mubr.bf16.mxu0 0
    %1054 = vmatmul.mubr.bf16.gmra.mxu0 %v862
    %v1055 = vpop.f32.mrf.mxu0
    %v1056 = vadd.f32 0.0, %v1055
    %v1057 = vpop.f32.mrf.mxu0
    %v1058 = vpop.f32.mrf.mxu0
    %v1059 = vadd.f32 0.0, %v1058
    %v1060 = vpop.f32.mrf.mxu0
    %1061 = vdwg.mxu0
    %1062 = vmatprep.subr.bf16.mxu0 0
    %1063 = vmatpush1.bf16.xpose.msra.mxu0 0
    %1064 = vmatprep.subr.bf16.mxu0 0
    %1065 = vmatpush1.bf16.xpose.msra.mxu0 0
    %1066 = vmatprep.subr.bf16.mxu0 0
    %1067 = vmatpush1.bf16.xpose.msra.mxu0 0
    %1068 = vmatprep.subr.bf16.mxu0 0
    %1069 = vmatpush1.bf16.xpose.msra.mxu0 0
    %1070 = vmatprep.subr.bf16.mxu0 0
    %1071 = vmatpush1.bf16.xpose.msra.mxu0 %v866
    %1072 = vmatprep.subr.bf16.mxu0 0
    %1073 = vmatpush1.bf16.xpose.msra.mxu0 %v865
    %1074 = vmatprep.subr.bf16.mxu0 0
    %1075 = vmatpush1.bf16.xpose.msra.mxu0 %v864
    %1076 = vmatprep.subr.bf16.mxu0 0
    %1077 = vmatpush1.bf16.xpose.msra.mxu0 %v863
    %1078 = vmatprep.subr.bf16.mxu0 0
    %1079 = vmatpush2.bf16.xpose.msra.mxu0 0
    %1080 = vmatprep.subr.bf16.mxu0 0
    %1081 = vmatpush2.bf16.xpose.msra.mxu0 0
    %1082 = vmatprep.subr.bf16.mxu0 0
    %1083 = vmatpush2.bf16.xpose.msra.mxu0 0
    %1084 = vmatprep.subr.bf16.mxu0 0
    %1085 = vmatpush2.bf16.xpose.msra.mxu0 0
    %1086 = vmatprep.subr.bf16.mxu0 0
    %1087 = vmatpush2.bf16.xpose.msra.mxu0 0
    %1088 = vmatprep.subr.bf16.mxu0 0
    %1089 = vmatpush2.bf16.xpose.msra.mxu0 0
    %1090 = vmatprep.subr.bf16.mxu0 0
    %1091 = vmatpush2.bf16.xpose.msra.mxu0 0
    %1092 = vmatprep.subr.bf16.mxu0 0
    %1093 = vmatpush2.bf16.xpose.msra.mxu0 0
    %1094 = vmatprep.mubr.bf16.mxu0 0
    %1095 = vmatmul.mubr.bf16.gmra.mxu0 %v863
    %v1096 = vpop.f32.mrf.mxu0
    %v1097 = vadd.f32 0.0, %v1096
    %v1098 = vpop.f32.mrf.mxu0
    %v1099 = vpop.f32.mrf.mxu0
    %v1100 = vadd.f32 0.0, %v1099
    %v1101 = vpop.f32.mrf.mxu0
    %1102 = vmatprep.mubr.bf16.mxu0 0
    %1103 = vmatmul.mubr.bf16.gmra.mxu0 %v864
    %v1104 = vpop.f32.mrf.mxu0
    %v1105 = vadd.f32 0.0, %v1104
    %v1106 = vpop.f32.mrf.mxu0
    %v1107 = vpop.f32.mrf.mxu0
    %v1108 = vadd.f32 0.0, %v1107
    %v1109 = vpop.f32.mrf.mxu0
    %1110 = vmatprep.mubr.bf16.mxu0 0
    %1111 = vmatmul.mubr.bf16.gmra.mxu0 %v865
    %v1112 = vpop.f32.mrf.mxu0
    %v1113 = vadd.f32 0.0, %v1112
    %v1114 = vpop.f32.mrf.mxu0
    %v1115 = vpop.f32.mrf.mxu0
    %v1116 = vadd.f32 0.0, %v1115
    %v1117 = vpop.f32.mrf.mxu0
    %1118 = vmatprep.mubr.bf16.mxu0 0
    %1119 = vmatmul.mubr.bf16.gmra.mxu0 %v866
    %v1120 = vpop.f32.mrf.mxu0
    %v1121 = vadd.f32 0.0, %v1120
    %v1122 = vpop.f32.mrf.mxu0
    %v1123 = vpop.f32.mrf.mxu0
    %v1124 = vadd.f32 0.0, %v1123
    %v1125 = vpop.f32.mrf.mxu0
    %1126 = vdwg.mxu0
    %vm1127 = vcmask 523264
    %v1128 = vsel %vm1127, %v902, 0.0
    %1129 = vadd.xlane.f32.xlu0 %v1128
    %v1130 = vpop.xlane.xlu0 %1129
    %v1131 = vsel %vm1127, %v905, 0.0
    %1132 = vadd.xlane.f32.xlu0 %v1131
    %v1133 = vpop.xlane.xlu0 %1132
    %v1134 = vsel %vm1127, %v910, 0.0
    %1135 = vadd.xlane.f32.xlu0 %v1134
    %v1136 = vpop.xlane.xlu0 %1135
    %v1137 = vsel %vm1127, %v913, 0.0
    %1138 = vadd.xlane.f32.xlu0 %v1137
    %v1139 = vpop.xlane.xlu0 %1138
    %v1140 = vsel %vm1127, %v918, 0.0
    %1141 = vadd.xlane.f32.xlu0 %v1140
    %v1142 = vpop.xlane.xlu0 %1141
    %v1143 = vsel %vm1127, %v921, 0.0
    %1144 = vadd.xlane.f32.xlu0 %v1143
    %v1145 = vpop.xlane.xlu0 %1144
    %v1146 = vsel %vm1127, %v926, 0.0
    %1147 = vadd.xlane.f32.xlu0 %v1146
    %v1148 = vpop.xlane.xlu0 %1147
    %v1149 = vsel %vm1127, %v929, 0.0
    %1150 = vadd.xlane.f32.xlu0 %v1149
    %v1151 = vpop.xlane.xlu0 %1150
    %v1152 = vsel %vm1127, %v967, 0.0
    %1153 = vadd.xlane.f32.xlu0 %v1152
    %v1154 = vpop.xlane.xlu0 %1153
    %v1155 = vsel %vm1127, %v970, 0.0
    %1156 = vadd.xlane.f32.xlu0 %v1155
    %v1157 = vpop.xlane.xlu0 %1156
    %v1158 = vsel %vm1127, %v975, 0.0
    %1159 = vadd.xlane.f32.xlu0 %v1158
    %v1160 = vpop.xlane.xlu0 %1159
    %v1161 = vsel %vm1127, %v978, 0.0
    %1162 = vadd.xlane.f32.xlu0 %v1161
    %v1163 = vpop.xlane.xlu0 %1162
    %v1164 = vsel %vm1127, %v983, 0.0
    %1165 = vadd.xlane.f32.xlu0 %v1164
    %v1166 = vpop.xlane.xlu0 %1165
    %v1167 = vsel %vm1127, %v986, 0.0
    %1168 = vadd.xlane.f32.xlu0 %v1167
    %v1169 = vpop.xlane.xlu0 %1168
    %v1170 = vsel %vm1127, %v991, 0.0
    %1171 = vadd.xlane.f32.xlu0 %v1170
    %v1172 = vpop.xlane.xlu0 %1171
    %v1173 = vsel %vm1127, %v994, 0.0
    %1174 = vadd.xlane.f32.xlu0 %v1173
    %v1175 = vpop.xlane.xlu0 %1174
    %v1176 = vsel %vm1127, %v1032, 0.0
    %1177 = vadd.xlane.f32.xlu0 %v1176
    %v1178 = vpop.xlane.xlu0 %1177
    %v1179 = vsel %vm1127, %v1035, 0.0
    %1180 = vadd.xlane.f32.xlu0 %v1179
    %v1181 = vpop.xlane.xlu0 %1180
    %v1182 = vsel %vm1127, %v1040, 0.0
    %1183 = vadd.xlane.f32.xlu0 %v1182
    %v1184 = vpop.xlane.xlu0 %1183
    %v1185 = vsel %vm1127, %v1043, 0.0
    %1186 = vadd.xlane.f32.xlu0 %v1185
    %v1187 = vpop.xlane.xlu0 %1186
    %v1188 = vsel %vm1127, %v1048, 0.0
    %1189 = vadd.xlane.f32.xlu0 %v1188
    %v1190 = vpop.xlane.xlu0 %1189
    %v1191 = vsel %vm1127, %v1051, 0.0
    %1192 = vadd.xlane.f32.xlu0 %v1191
    %v1193 = vpop.xlane.xlu0 %1192
    %v1194 = vsel %vm1127, %v1056, 0.0
    %1195 = vadd.xlane.f32.xlu0 %v1194
    %v1196 = vpop.xlane.xlu0 %1195
    %v1197 = vsel %vm1127, %v1059, 0.0
    %1198 = vadd.xlane.f32.xlu0 %v1197
    %v1199 = vpop.xlane.xlu0 %1198
    %v1200 = vsel %vm1127, %v1097, 0.0
    %1201 = vadd.xlane.f32.xlu0 %v1200
    %v1202 = vpop.xlane.xlu0 %1201
    %v1203 = vsel %vm1127, %v1100, 0.0
    %1204 = vadd.xlane.f32.xlu0 %v1203
    %v1205 = vpop.xlane.xlu0 %1204
    %v1206 = vsel %vm1127, %v1105, 0.0
    %1207 = vadd.xlane.f32.xlu0 %v1206
    %v1208 = vpop.xlane.xlu0 %1207
    %v1209 = vsel %vm1127, %v1108, 0.0
    %1210 = vadd.xlane.f32.xlu0 %v1209
    %v1211 = vpop.xlane.xlu0 %1210
    %v1212 = vsel %vm1127, %v1113, 0.0
    %1213 = vadd.xlane.f32.xlu0 %v1212
    %v1214 = vpop.xlane.xlu0 %1213
    %v1215 = vsel %vm1127, %v1116, 0.0
    %1216 = vadd.xlane.f32.xlu0 %v1215
    %v1217 = vpop.xlane.xlu0 %1216
    %v1218 = vsel %vm1127, %v1121, 0.0
    %1219 = vadd.xlane.f32.xlu0 %v1218
    %v1220 = vpop.xlane.xlu0 %1219
    %v1221 = vsel %vm1127, %v1124, 0.0
    %1222 = vadd.xlane.f32.xlu0 %v1221
    %v1223 = vpop.xlane.xlu0 %1222
    %v1224 = vadd.f32 %v1130, 1.0
    %v1225 = vadd.f32 %v1133, 1.0
    %v1226 = vadd.f32 %v1136, 1.0
    %v1227 = vadd.f32 %v1139, 1.0
    %v1228 = vadd.f32 %v1142, 1.0
    %v1229 = vadd.f32 %v1145, 1.0
    %v1230 = vadd.f32 %v1148, 1.0
    %v1231 = vadd.f32 %v1151, 1.0
    %v1232 = vadd.f32 %v1154, 1.0
    %v1233 = vadd.f32 %v1157, 1.0
    %v1234 = vadd.f32 %v1160, 1.0
    %v1235 = vadd.f32 %v1163, 1.0
    %v1236 = vadd.f32 %v1166, 1.0
    %v1237 = vadd.f32 %v1169, 1.0
    %v1238 = vadd.f32 %v1172, 1.0
    %v1239 = vadd.f32 %v1175, 1.0
    %v1240 = vadd.f32 %v1178, 1.0
    %v1241 = vadd.f32 %v1181, 1.0
    %v1242 = vadd.f32 %v1184, 1.0
    %v1243 = vadd.f32 %v1187, 1.0
    %v1244 = vadd.f32 %v1190, 1.0
    %v1245 = vadd.f32 %v1193, 1.0
    %v1246 = vadd.f32 %v1196, 1.0
    %v1247 = vadd.f32 %v1199, 1.0
    %v1248 = vadd.f32 %v1202, 1.0
    %v1249 = vadd.f32 %v1205, 1.0
    %v1250 = vadd.f32 %v1208, 1.0
    %v1251 = vadd.f32 %v1211, 1.0
    %v1252 = vadd.f32 %v1214, 1.0
    %v1253 = vadd.f32 %v1217, 1.0
    %v1254 = vadd.f32 %v1220, 1.0
    %v1255 = vadd.f32 %v1223, 1.0
    %v1256 = vmax.f32 %v1224, 1e-06
    %v1257 = vmax.f32 %v1225, 1e-06
    %v1258 = vmax.f32 %v1226, 1e-06
    %v1259 = vmax.f32 %v1227, 1e-06
    %v1260 = vmax.f32 %v1228, 1e-06
    %v1261 = vmax.f32 %v1229, 1e-06
    %v1262 = vmax.f32 %v1230, 1e-06
    %v1263 = vmax.f32 %v1231, 1e-06
    %v1264 = vmax.f32 %v1232, 1e-06
    %v1265 = vmax.f32 %v1233, 1e-06
    %v1266 = vmax.f32 %v1234, 1e-06
    %v1267 = vmax.f32 %v1235, 1e-06
    %v1268 = vmax.f32 %v1236, 1e-06
    %v1269 = vmax.f32 %v1237, 1e-06
    %v1270 = vmax.f32 %v1238, 1e-06
    %v1271 = vmax.f32 %v1239, 1e-06
    %v1272 = vmax.f32 %v1240, 1e-06
    %v1273 = vmax.f32 %v1241, 1e-06
    %v1274 = vmax.f32 %v1242, 1e-06
    %v1275 = vmax.f32 %v1243, 1e-06
    %v1276 = vmax.f32 %v1244, 1e-06
    %v1277 = vmax.f32 %v1245, 1e-06
    %v1278 = vmax.f32 %v1246, 1e-06
    %v1279 = vmax.f32 %v1247, 1e-06
    %v1280 = vmax.f32 %v1248, 1e-06
    %v1281 = vmax.f32 %v1249, 1e-06
    %v1282 = vmax.f32 %v1250, 1e-06
    %v1283 = vmax.f32 %v1251, 1e-06
    %v1284 = vmax.f32 %v1252, 1e-06
    %v1285 = vmax.f32 %v1253, 1e-06
    %v1286 = vmax.f32 %v1254, 1e-06
    %v1287 = vmax.f32 %v1255, 1e-06
    %v1288 = vrsqrt.pop %v1256
    %v1289 = vrsqrt.pop %v1257
    %v1290 = vrsqrt.pop %v1258
    %v1291 = vrsqrt.pop %v1259
    %v1292 = vrsqrt.pop %v1260
    %v1293 = vrsqrt.pop %v1261
    %v1294 = vrsqrt.pop %v1262
    %v1295 = vrsqrt.pop %v1263
    %v1296 = vrsqrt.pop %v1264
    %v1297 = vrsqrt.pop %v1265
    %v1298 = vrsqrt.pop %v1266
    %v1299 = vrsqrt.pop %v1267
    %v1300 = vrsqrt.pop %v1268
    %v1301 = vrsqrt.pop %v1269
    %v1302 = vrsqrt.pop %v1270
    %v1303 = vrsqrt.pop %v1271
    %v1304 = vrsqrt.pop %v1272
    %v1305 = vrsqrt.pop %v1273
    %v1306 = vrsqrt.pop %v1274
    %v1307 = vrsqrt.pop %v1275
    %v1308 = vrsqrt.pop %v1276
    %v1309 = vrsqrt.pop %v1277
    %v1310 = vrsqrt.pop %v1278
    %v1311 = vrsqrt.pop %v1279
    %v1312 = vrsqrt.pop %v1280
    %v1313 = vrsqrt.pop %v1281
    %v1314 = vrsqrt.pop %v1282
    %v1315 = vrsqrt.pop %v1283
    %v1316 = vrsqrt.pop %v1284
    %v1317 = vrsqrt.pop %v1285
    %v1318 = vrsqrt.pop %v1286
    %v1319 = vrsqrt.pop %v1287
    %v1320 = vpack.c.bf16 %v905, %v902
    %v1321 = vpack.c.bf16 %v913, %v910
    %v1322 = vpack.c.bf16 %v921, %v918
    %v1323 = vpack.c.bf16 %v929, %v926
    %v1324 = vpack.c.bf16 %v970, %v967
    %v1325 = vpack.c.bf16 %v978, %v975
    %v1326 = vpack.c.bf16 %v986, %v983
    %v1327 = vpack.c.bf16 %v994, %v991
    %v1328 = vpack.c.bf16 %v1035, %v1032
    %v1329 = vpack.c.bf16 %v1043, %v1040
    %v1330 = vpack.c.bf16 %v1051, %v1048
    %v1331 = vpack.c.bf16 %v1059, %v1056
    %v1332 = vpack.c.bf16 %v1100, %v1097
    %v1333 = vpack.c.bf16 %v1108, %v1105
    %v1334 = vpack.c.bf16 %v1116, %v1113
    %v1335 = vpack.c.bf16 %v1124, %v1121
    %v1336 = vpack.c.bf16 %v364, %v363
    %v1337 = vpack.c.bf16 %v366, %v365
    %v1338 = vpack.c.bf16 %v368, %v367
    %v1339 = vpack.c.bf16 %v370, %v369
    %v1340 = vpack.c.bf16 %v372, %v371
    %v1341 = vpack.c.bf16 %v374, %v373
    %v1342 = vpack.c.bf16 %v376, %v375
    %v1343 = vpack.c.bf16 %v378, %v377
    %v1344 = vpack.c.bf16 %v380, %v379
    %v1345 = vpack.c.bf16 %v382, %v381
    %v1346 = vpack.c.bf16 %v384, %v383
    %v1347 = vpack.c.bf16 %v386, %v385
    %v1348 = vpack.c.bf16 %v388, %v387
    %v1349 = vpack.c.bf16 %v390, %v389
    %v1350 = vpack.c.bf16 %v392, %v391
    %v1351 = vpack.c.bf16 %v394, %v393
    %v1352 = vld [vmem:[#allocation8] sm:$0xf]
    %v1353 = vld [vmem:[#allocation8 + $0x4] sm:$0xf]
    %v1354 = vld [vmem:[#allocation8 + $0x8] sm:$0xf]
    %v1355 = vld [vmem:[#allocation8 + $0xc] sm:$0xf]
    %v1356 = vld [vmem:[#allocation8 + $0x10] sm:$0xf]
    %v1357 = vld [vmem:[#allocation8 + $0x14] sm:$0xf]
    %v1358 = vld [vmem:[#allocation8 + $0x18] sm:$0xf]
    %v1359 = vld [vmem:[#allocation8 + $0x1c] sm:$0xf]
    %v1360 = vld [vmem:[#allocation8 + $0x20] sm:$0xf]
    %v1361 = vld [vmem:[#allocation8 + $0x24] sm:$0xf]
    %v1362 = vld [vmem:[#allocation8 + $0x28] sm:$0xf]
    %v1363 = vld [vmem:[#allocation8 + $0x2c] sm:$0xf]
    %v1364 = vld [vmem:[#allocation8 + $0x30] sm:$0xf]
    %v1365 = vld [vmem:[#allocation8 + $0x34] sm:$0xf]
    %v1366 = vld [vmem:[#allocation8 + $0x38] sm:$0xf]
    %v1367 = vld [vmem:[#allocation8 + $0x3c] sm:$0xf]
    %v1384 = vunpack.c.l.b16 %v1352
    %v1385 = vunpack.c.l.b16 %v1353
    %v1386 = vunpack.c.l.b16 %v1354
    %v1387 = vunpack.c.l.b16 %v1355
    %v1388 = vunpack.c.l.b16 %v1356
    %v1389 = vunpack.c.l.b16 %v1357
    %v1390 = vunpack.c.l.b16 %v1358
    %v1391 = vunpack.c.l.b16 %v1359
    %v1392 = vunpack.c.l.b16 %v1360
    %v1393 = vunpack.c.l.b16 %v1361
    %v1394 = vunpack.c.l.b16 %v1362
    %v1395 = vunpack.c.l.b16 %v1363
    %v1396 = vunpack.c.l.b16 %v1364
    %v1397 = vunpack.c.l.b16 %v1365
    %v1398 = vunpack.c.l.b16 %v1366
    %v1399 = vunpack.c.l.b16 %v1367
    %v1400 = vpack.c.b16 %v1385, %v1384
    %v1401 = vpack.c.b16 %v1387, %v1386
    %v1402 = vpack.c.b16 %v1389, %v1388
    %v1403 = vpack.c.b16 %v1391, %v1390
    %v1404 = vpack.c.b16 %v1393, %v1392
    %v1405 = vpack.c.b16 %v1395, %v1394
    %v1406 = vpack.c.b16 %v1397, %v1396
    %v1407 = vpack.c.b16 %v1399, %v1398
    %1416 = vmatprep.subr.bf16.mxu0 0
    %1417 = vmatpush1.bf16.msra.mxu0 %v1407
    %1418 = vmatprep.subr.bf16.mxu0 0
    %1419 = vmatpush1.bf16.msra.mxu0 %v1406
    %1420 = vmatprep.subr.bf16.mxu0 0
    %1421 = vmatpush1.bf16.msra.mxu0 %v1405
    %1422 = vmatprep.subr.bf16.mxu0 0
    %1423 = vmatpush1.bf16.msra.mxu0 %v1404
    %1424 = vmatprep.subr.bf16.mxu0 0
    %1425 = vmatpush1.bf16.msra.mxu0 %v1403
    %1426 = vmatprep.subr.bf16.mxu0 0
    %1427 = vmatpush1.bf16.msra.mxu0 %v1402
    %1428 = vmatprep.subr.bf16.mxu0 0
    %1429 = vmatpush1.bf16.msra.mxu0 %v1401
    %1430 = vmatprep.subr.bf16.mxu0 0
    %1431 = vmatpush1.bf16.msra.mxu0 %v1400
    %1432 = vmatprep.subr.bf16.mxu0 0
    %1433 = vmatpush2.bf16.msra.mxu0 0
    %1434 = vmatprep.subr.bf16.mxu0 0
    %1435 = vmatpush2.bf16.msra.mxu0 0
    %1436 = vmatprep.subr.bf16.mxu0 0
    %1437 = vmatpush2.bf16.msra.mxu0 0
    %1438 = vmatprep.subr.bf16.mxu0 0
    %1439 = vmatpush2.bf16.msra.mxu0 0
    %1440 = vmatprep.subr.bf16.mxu0 0
    %1441 = vmatpush2.bf16.msra.mxu0 0
    %1442 = vmatprep.subr.bf16.mxu0 0
    %1443 = vmatpush2.bf16.msra.mxu0 0
    %1444 = vmatprep.subr.bf16.mxu0 0
    %1445 = vmatpush2.bf16.msra.mxu0 0
    %1446 = vmatprep.subr.bf16.mxu0 0
    %1447 = vmatpush2.bf16.msra.mxu0 0
    %1448 = vmatprep.mubr.bf16.mxu0 0
    %1449 = vmatmul.mubr.bf16.gmra.mxu0 %v1336
    %v1450 = vpop.f32.mrf.mxu0
    %v1451 = vadd.f32 0.0, %v1450
    %v1452 = vpop.f32.mrf.mxu0
    %v1453 = vpop.f32.mrf.mxu0
    %v1454 = vadd.f32 0.0, %v1453
    %v1455 = vpop.f32.mrf.mxu0
    %1456 = vmatprep.mubr.bf16.mxu0 0
    %1457 = vmatmul.mubr.bf16.gmra.mxu0 %v1337
    %v1458 = vpop.f32.mrf.mxu0
    %v1459 = vadd.f32 0.0, %v1458
    %v1460 = vpop.f32.mrf.mxu0
    %v1461 = vpop.f32.mrf.mxu0
    %v1462 = vadd.f32 0.0, %v1461
    %v1463 = vpop.f32.mrf.mxu0
    %1464 = vmatprep.mubr.bf16.mxu0 0
    %1465 = vmatmul.mubr.bf16.gmra.mxu0 %v1338
    %v1466 = vpop.f32.mrf.mxu0
    %v1467 = vadd.f32 0.0, %v1466
    %v1468 = vpop.f32.mrf.mxu0
    %v1469 = vpop.f32.mrf.mxu0
    %v1470 = vadd.f32 0.0, %v1469
    %v1471 = vpop.f32.mrf.mxu0
    %1472 = vmatprep.mubr.bf16.mxu0 0
    %1473 = vmatmul.mubr.bf16.gmra.mxu0 %v1339
    %v1474 = vpop.f32.mrf.mxu0
    %v1475 = vadd.f32 0.0, %v1474
    %v1476 = vpop.f32.mrf.mxu0
    %v1477 = vpop.f32.mrf.mxu0
    %v1478 = vadd.f32 0.0, %v1477
    %v1479 = vpop.f32.mrf.mxu0
    %1480 = vmatprep.mubr.bf16.mxu0 0
    %1481 = vmatmul.mubr.bf16.gmra.mxu0 %v1340
    %v1482 = vpop.f32.mrf.mxu0
    %v1483 = vadd.f32 0.0, %v1482
    %v1484 = vpop.f32.mrf.mxu0
    %v1485 = vpop.f32.mrf.mxu0
    %v1486 = vadd.f32 0.0, %v1485
    %v1487 = vpop.f32.mrf.mxu0
    %1488 = vmatprep.mubr.bf16.mxu0 0
    %1489 = vmatmul.mubr.bf16.gmra.mxu0 %v1341
    %v1490 = vpop.f32.mrf.mxu0
    %v1491 = vadd.f32 0.0, %v1490
    %v1492 = vpop.f32.mrf.mxu0
    %v1493 = vpop.f32.mrf.mxu0
    %v1494 = vadd.f32 0.0, %v1493
    %v1495 = vpop.f32.mrf.mxu0
    %1496 = vmatprep.mubr.bf16.mxu0 0
    %1497 = vmatmul.mubr.bf16.gmra.mxu0 %v1342
    %v1498 = vpop.f32.mrf.mxu0
    %v1499 = vadd.f32 0.0, %v1498
    %v1500 = vpop.f32.mrf.mxu0
    %v1501 = vpop.f32.mrf.mxu0
    %v1502 = vadd.f32 0.0, %v1501
    %v1503 = vpop.f32.mrf.mxu0
    %1504 = vmatprep.mubr.bf16.mxu0 0
    %1505 = vmatmul.mubr.bf16.gmra.mxu0 %v1343
    %v1506 = vpop.f32.mrf.mxu0
    %v1507 = vadd.f32 0.0, %v1506
    %v1508 = vpop.f32.mrf.mxu0
    %v1509 = vpop.f32.mrf.mxu0
    %v1510 = vadd.f32 0.0, %v1509
    %v1511 = vpop.f32.mrf.mxu0
    %1512 = vmatprep.mubr.bf16.mxu0 0
    %1513 = vmatmul.mubr.bf16.gmra.mxu0 %v1344
    %v1514 = vpop.f32.mrf.mxu0
    %v1515 = vadd.f32 0.0, %v1514
    %v1516 = vpop.f32.mrf.mxu0
    %v1517 = vpop.f32.mrf.mxu0
    %v1518 = vadd.f32 0.0, %v1517
    %v1519 = vpop.f32.mrf.mxu0
    %1520 = vmatprep.mubr.bf16.mxu0 0
    %1521 = vmatmul.mubr.bf16.gmra.mxu0 %v1345
    %v1522 = vpop.f32.mrf.mxu0
    %v1523 = vadd.f32 0.0, %v1522
    %v1524 = vpop.f32.mrf.mxu0
    %v1525 = vpop.f32.mrf.mxu0
    %v1526 = vadd.f32 0.0, %v1525
    %v1527 = vpop.f32.mrf.mxu0
    %1528 = vmatprep.mubr.bf16.mxu0 0
    %1529 = vmatmul.mubr.bf16.gmra.mxu0 %v1346
    %v1530 = vpop.f32.mrf.mxu0
    %v1531 = vadd.f32 0.0, %v1530
    %v1532 = vpop.f32.mrf.mxu0
    %v1533 = vpop.f32.mrf.mxu0
    %v1534 = vadd.f32 0.0, %v1533
    %v1535 = vpop.f32.mrf.mxu0
    %1536 = vmatprep.mubr.bf16.mxu0 0
    %1537 = vmatmul.mubr.bf16.gmra.mxu0 %v1347
    %v1538 = vpop.f32.mrf.mxu0
    %v1539 = vadd.f32 0.0, %v1538
    %v1540 = vpop.f32.mrf.mxu0
    %v1541 = vpop.f32.mrf.mxu0
    %v1542 = vadd.f32 0.0, %v1541
    %v1543 = vpop.f32.mrf.mxu0
    %1544 = vmatprep.mubr.bf16.mxu0 0
    %1545 = vmatmul.mubr.bf16.gmra.mxu0 %v1348
    %v1546 = vpop.f32.mrf.mxu0
    %v1547 = vadd.f32 0.0, %v1546
    %v1548 = vpop.f32.mrf.mxu0
    %v1549 = vpop.f32.mrf.mxu0
    %v1550 = vadd.f32 0.0, %v1549
    %v1551 = vpop.f32.mrf.mxu0
    %1552 = vmatprep.mubr.bf16.mxu0 0
    %1553 = vmatmul.mubr.bf16.gmra.mxu0 %v1349
    %v1554 = vpop.f32.mrf.mxu0
    %v1555 = vadd.f32 0.0, %v1554
    %v1556 = vpop.f32.mrf.mxu0
    %v1557 = vpop.f32.mrf.mxu0
    %v1558 = vadd.f32 0.0, %v1557
    %v1559 = vpop.f32.mrf.mxu0
    %1560 = vmatprep.mubr.bf16.mxu0 0
    %1561 = vmatmul.mubr.bf16.gmra.mxu0 %v1350
    %v1562 = vpop.f32.mrf.mxu0
    %v1563 = vadd.f32 0.0, %v1562
    %v1564 = vpop.f32.mrf.mxu0
    %v1565 = vpop.f32.mrf.mxu0
    %v1566 = vadd.f32 0.0, %v1565
    %v1567 = vpop.f32.mrf.mxu0
    %1568 = vmatprep.mubr.bf16.mxu0 0
    %1569 = vmatmul.mubr.bf16.gmra.mxu0 %v1351
    %v1570 = vpop.f32.mrf.mxu0
    %v1571 = vadd.f32 0.0, %v1570
    %v1572 = vpop.f32.mrf.mxu0
    %v1573 = vpop.f32.mrf.mxu0
    %v1574 = vadd.f32 0.0, %v1573
    %v1575 = vpop.f32.mrf.mxu0
    %1576 = vdwg.mxu0
    %v1577 = vmul.f32 %v1288, %v1451
    %v1578 = vmul.f32 %v1289, %v1454
    %v1579 = vmul.f32 %v1290, %v1459
    %v1580 = vmul.f32 %v1291, %v1462
    %v1581 = vmul.f32 %v1292, %v1467
    %v1582 = vmul.f32 %v1293, %v1470
    %v1583 = vmul.f32 %v1294, %v1475
    %v1584 = vmul.f32 %v1295, %v1478
    %v1585 = vmul.f32 %v1296, %v1483
    %v1586 = vmul.f32 %v1297, %v1486
    %v1587 = vmul.f32 %v1298, %v1491
    %v1588 = vmul.f32 %v1299, %v1494
    %v1589 = vmul.f32 %v1300, %v1499
    %v1590 = vmul.f32 %v1301, %v1502
    %v1591 = vmul.f32 %v1302, %v1507
    %v1592 = vmul.f32 %v1303, %v1510
    %v1593 = vmul.f32 %v1304, %v1515
    %v1594 = vmul.f32 %v1305, %v1518
    %v1595 = vmul.f32 %v1306, %v1523
    %v1596 = vmul.f32 %v1307, %v1526
    %v1597 = vmul.f32 %v1308, %v1531
    %v1598 = vmul.f32 %v1309, %v1534
    %v1599 = vmul.f32 %v1310, %v1539
    %v1600 = vmul.f32 %v1311, %v1542
    %v1601 = vmul.f32 %v1312, %v1547
    %v1602 = vmul.f32 %v1313, %v1550
    %v1603 = vmul.f32 %v1314, %v1555
    %v1604 = vmul.f32 %v1315, %v1558
    %v1605 = vmul.f32 %v1316, %v1563
    %v1606 = vmul.f32 %v1317, %v1566
    %v1607 = vmul.f32 %v1318, %v1571
    %v1608 = vmul.f32 %v1319, %v1574
    %v1609 = vpack.c.bf16 %v1578, %v1577
    %v1610 = vpack.c.bf16 %v1580, %v1579
    %v1611 = vpack.c.bf16 %v1582, %v1581
    %v1612 = vpack.c.bf16 %v1584, %v1583
    %v1613 = vpack.c.bf16 %v1586, %v1585
    %v1614 = vpack.c.bf16 %v1588, %v1587
    %v1615 = vpack.c.bf16 %v1590, %v1589
    %v1616 = vpack.c.bf16 %v1592, %v1591
    %v1617 = vpack.c.bf16 %v1594, %v1593
    %v1618 = vpack.c.bf16 %v1596, %v1595
    %v1619 = vpack.c.bf16 %v1598, %v1597
    %v1620 = vpack.c.bf16 %v1600, %v1599
    %v1621 = vpack.c.bf16 %v1602, %v1601
    %v1622 = vpack.c.bf16 %v1604, %v1603
    %v1623 = vpack.c.bf16 %v1606, %v1605
    %v1624 = vpack.c.bf16 %v1608, %v1607
    %v1626 = vsel %vm1127, %v1320, 0
    %v1629 = vsel %vm1127, %v1321, 0
    %v1632 = vsel %vm1127, %v1322, 0
    %v1635 = vsel %vm1127, %v1323, 0
    %1637 = vmatprep.subr.bf16.mxu0 0
    %1638 = vmatpush1.bf16.msra.mxu0 0
    %1639 = vmatprep.subr.bf16.mxu0 0
    %1640 = vmatpush1.bf16.msra.mxu0 0
    %1641 = vmatprep.subr.bf16.mxu0 0
    %1642 = vmatpush1.bf16.msra.mxu0 0
    %1643 = vmatprep.subr.bf16.mxu0 0
    %1644 = vmatpush1.bf16.msra.mxu0 0
    %1645 = vmatprep.subr.bf16.mxu0 0
    %1646 = vmatpush1.bf16.msra.mxu0 %v1612
    %1647 = vmatprep.subr.bf16.mxu0 0
    %1648 = vmatpush1.bf16.msra.mxu0 %v1611
    %1649 = vmatprep.subr.bf16.mxu0 0
    %1650 = vmatpush1.bf16.msra.mxu0 %v1610
    %1651 = vmatprep.subr.bf16.mxu0 0
    %1652 = vmatpush1.bf16.msra.mxu0 %v1609
    %1653 = vmatprep.subr.bf16.mxu0 0
    %1654 = vmatpush2.bf16.msra.mxu0 0
    %1655 = vmatprep.subr.bf16.mxu0 0
    %1656 = vmatpush2.bf16.msra.mxu0 0
    %1657 = vmatprep.subr.bf16.mxu0 0
    %1658 = vmatpush2.bf16.msra.mxu0 0
    %1659 = vmatprep.subr.bf16.mxu0 0
    %1660 = vmatpush2.bf16.msra.mxu0 0
    %1661 = vmatprep.subr.bf16.mxu0 0
    %1662 = vmatpush2.bf16.msra.mxu0 0
    %1663 = vmatprep.subr.bf16.mxu0 0
    %1664 = vmatpush2.bf16.msra.mxu0 0
    %1665 = vmatprep.subr.bf16.mxu0 0
    %1666 = vmatpush2.bf16.msra.mxu0 0
    %1667 = vmatprep.subr.bf16.mxu0 0
    %1668 = vmatpush2.bf16.msra.mxu0 0
    %1669 = vmatprep.mubr.bf16.mxu0 0
    %1670 = vmatmul.mubr.bf16.gmra.mxu0 %v1626
    %v1671 = vpop.f32.mrf.mxu0
    %v1672 = vadd.f32 %v1577, %v1671
    %v1673 = vpop.f32.mrf.mxu0
    %v1674 = vpop.f32.mrf.mxu0
    %v1675 = vadd.f32 %v1578, %v1674
    %v1676 = vpop.f32.mrf.mxu0
    %1677 = vmatprep.mubr.bf16.mxu0 0
    %1678 = vmatmul.mubr.bf16.gmra.mxu0 %v1629
    %v1679 = vpop.f32.mrf.mxu0
    %v1680 = vadd.f32 %v1579, %v1679
    %v1681 = vpop.f32.mrf.mxu0
    %v1682 = vpop.f32.mrf.mxu0
    %v1683 = vadd.f32 %v1580, %v1682
    %v1684 = vpop.f32.mrf.mxu0
    %1685 = vmatprep.mubr.bf16.mxu0 0
    %1686 = vmatmul.mubr.bf16.gmra.mxu0 %v1632
    %v1687 = vpop.f32.mrf.mxu0
    %v1688 = vadd.f32 %v1581, %v1687
    %v1689 = vpop.f32.mrf.mxu0
    %v1690 = vpop.f32.mrf.mxu0
    %v1691 = vadd.f32 %v1582, %v1690
    %v1692 = vpop.f32.mrf.mxu0
    %1693 = vmatprep.mubr.bf16.mxu0 0
    %1694 = vmatmul.mubr.bf16.gmra.mxu0 %v1635
    %v1695 = vpop.f32.mrf.mxu0
    %v1696 = vadd.f32 %v1583, %v1695
    %v1697 = vpop.f32.mrf.mxu0
    %v1698 = vpop.f32.mrf.mxu0
    %v1699 = vadd.f32 %v1584, %v1698
    %v1700 = vpop.f32.mrf.mxu0
    %1701 = vdwg.mxu0
    %v1703 = vsel %vm1127, %v1324, 0
    %v1706 = vsel %vm1127, %v1325, 0
    %v1709 = vsel %vm1127, %v1326, 0
    %v1712 = vsel %vm1127, %v1327, 0
    %1714 = vmatprep.subr.bf16.mxu0 0
    %1715 = vmatpush1.bf16.msra.mxu0 0
    %1716 = vmatprep.subr.bf16.mxu0 0
    %1717 = vmatpush1.bf16.msra.mxu0 0
    %1718 = vmatprep.subr.bf16.mxu0 0
    %1719 = vmatpush1.bf16.msra.mxu0 0
    %1720 = vmatprep.subr.bf16.mxu0 0
    %1721 = vmatpush1.bf16.msra.mxu0 0
    %1722 = vmatprep.subr.bf16.mxu0 0
    %1723 = vmatpush1.bf16.msra.mxu0 %v1616
    %1724 = vmatprep.subr.bf16.mxu0 0
    %1725 = vmatpush1.bf16.msra.mxu0 %v1615
    %1726 = vmatprep.subr.bf16.mxu0 0
    %1727 = vmatpush1.bf16.msra.mxu0 %v1614
    %1728 = vmatprep.subr.bf16.mxu0 0
    %1729 = vmatpush1.bf16.msra.mxu0 %v1613
    %1730 = vmatprep.subr.bf16.mxu0 0
    %1731 = vmatpush2.bf16.msra.mxu0 0
    %1732 = vmatprep.subr.bf16.mxu0 0
    %1733 = vmatpush2.bf16.msra.mxu0 0
    %1734 = vmatprep.subr.bf16.mxu0 0
    %1735 = vmatpush2.bf16.msra.mxu0 0
    %1736 = vmatprep.subr.bf16.mxu0 0
    %1737 = vmatpush2.bf16.msra.mxu0 0
    %1738 = vmatprep.subr.bf16.mxu0 0
    %1739 = vmatpush2.bf16.msra.mxu0 0
    %1740 = vmatprep.subr.bf16.mxu0 0
    %1741 = vmatpush2.bf16.msra.mxu0 0
    %1742 = vmatprep.subr.bf16.mxu0 0
    %1743 = vmatpush2.bf16.msra.mxu0 0
    %1744 = vmatprep.subr.bf16.mxu0 0
    %1745 = vmatpush2.bf16.msra.mxu0 0
    %1746 = vmatprep.mubr.bf16.mxu0 0
    %1747 = vmatmul.mubr.bf16.gmra.mxu0 %v1703
    %v1748 = vpop.f32.mrf.mxu0
    %v1749 = vadd.f32 %v1585, %v1748
    %v1750 = vpop.f32.mrf.mxu0
    %v1751 = vpop.f32.mrf.mxu0
    %v1752 = vadd.f32 %v1586, %v1751
    %v1753 = vpop.f32.mrf.mxu0
    %1754 = vmatprep.mubr.bf16.mxu0 0
    %1755 = vmatmul.mubr.bf16.gmra.mxu0 %v1706
    %v1756 = vpop.f32.mrf.mxu0
    %v1757 = vadd.f32 %v1587, %v1756
    %v1758 = vpop.f32.mrf.mxu0
    %v1759 = vpop.f32.mrf.mxu0
    %v1760 = vadd.f32 %v1588, %v1759
    %v1761 = vpop.f32.mrf.mxu0
    %1762 = vmatprep.mubr.bf16.mxu0 0
    %1763 = vmatmul.mubr.bf16.gmra.mxu0 %v1709
    %v1764 = vpop.f32.mrf.mxu0
    %v1765 = vadd.f32 %v1589, %v1764
    %v1766 = vpop.f32.mrf.mxu0
    %v1767 = vpop.f32.mrf.mxu0
    %v1768 = vadd.f32 %v1590, %v1767
    %v1769 = vpop.f32.mrf.mxu0
    %1770 = vmatprep.mubr.bf16.mxu0 0
    %1771 = vmatmul.mubr.bf16.gmra.mxu0 %v1712
    %v1772 = vpop.f32.mrf.mxu0
    %v1773 = vadd.f32 %v1591, %v1772
    %v1774 = vpop.f32.mrf.mxu0
    %v1775 = vpop.f32.mrf.mxu0
    %v1776 = vadd.f32 %v1592, %v1775
    %v1777 = vpop.f32.mrf.mxu0
    %1778 = vdwg.mxu0
    %v1780 = vsel %vm1127, %v1328, 0
    %v1783 = vsel %vm1127, %v1329, 0
    %v1786 = vsel %vm1127, %v1330, 0
    %v1789 = vsel %vm1127, %v1331, 0
    %1791 = vmatprep.subr.bf16.mxu0 0
    %1792 = vmatpush1.bf16.msra.mxu0 0
    %1793 = vmatprep.subr.bf16.mxu0 0
    %1794 = vmatpush1.bf16.msra.mxu0 0
    %1795 = vmatprep.subr.bf16.mxu0 0
    %1796 = vmatpush1.bf16.msra.mxu0 0
    %1797 = vmatprep.subr.bf16.mxu0 0
    %1798 = vmatpush1.bf16.msra.mxu0 0
    %1799 = vmatprep.subr.bf16.mxu0 0
    %1800 = vmatpush1.bf16.msra.mxu0 %v1620
    %1801 = vmatprep.subr.bf16.mxu0 0
    %1802 = vmatpush1.bf16.msra.mxu0 %v1619
    %1803 = vmatprep.subr.bf16.mxu0 0
    %1804 = vmatpush1.bf16.msra.mxu0 %v1618
    %1805 = vmatprep.subr.bf16.mxu0 0
    %1806 = vmatpush1.bf16.msra.mxu0 %v1617
    %1807 = vmatprep.subr.bf16.mxu0 0
    %1808 = vmatpush2.bf16.msra.mxu0 0
    %1809 = vmatprep.subr.bf16.mxu0 0
    %1810 = vmatpush2.bf16.msra.mxu0 0
    %1811 = vmatprep.subr.bf16.mxu0 0
    %1812 = vmatpush2.bf16.msra.mxu0 0
    %1813 = vmatprep.subr.bf16.mxu0 0
    %1814 = vmatpush2.bf16.msra.mxu0 0
    %1815 = vmatprep.subr.bf16.mxu0 0
    %1816 = vmatpush2.bf16.msra.mxu0 0
    %1817 = vmatprep.subr.bf16.mxu0 0
    %1818 = vmatpush2.bf16.msra.mxu0 0
    %1819 = vmatprep.subr.bf16.mxu0 0
    %1820 = vmatpush2.bf16.msra.mxu0 0
    %1821 = vmatprep.subr.bf16.mxu0 0
    %1822 = vmatpush2.bf16.msra.mxu0 0
    %1823 = vmatprep.mubr.bf16.mxu0 0
    %1824 = vmatmul.mubr.bf16.gmra.mxu0 %v1780
    %v1825 = vpop.f32.mrf.mxu0
    %v1826 = vadd.f32 %v1593, %v1825
    %v1827 = vpop.f32.mrf.mxu0
    %v1828 = vpop.f32.mrf.mxu0
    %v1829 = vadd.f32 %v1594, %v1828
    %v1830 = vpop.f32.mrf.mxu0
    %1831 = vmatprep.mubr.bf16.mxu0 0
    %1832 = vmatmul.mubr.bf16.gmra.mxu0 %v1783
    %v1833 = vpop.f32.mrf.mxu0
    %v1834 = vadd.f32 %v1595, %v1833
    %v1835 = vpop.f32.mrf.mxu0
    %v1836 = vpop.f32.mrf.mxu0
    %v1837 = vadd.f32 %v1596, %v1836
    %v1838 = vpop.f32.mrf.mxu0
    %1839 = vmatprep.mubr.bf16.mxu0 0
    %1840 = vmatmul.mubr.bf16.gmra.mxu0 %v1786
    %v1841 = vpop.f32.mrf.mxu0
    %v1842 = vadd.f32 %v1597, %v1841
    %v1843 = vpop.f32.mrf.mxu0
    %v1844 = vpop.f32.mrf.mxu0
    %v1845 = vadd.f32 %v1598, %v1844
    %v1846 = vpop.f32.mrf.mxu0
    %1847 = vmatprep.mubr.bf16.mxu0 0
    %1848 = vmatmul.mubr.bf16.gmra.mxu0 %v1789
    %v1849 = vpop.f32.mrf.mxu0
    %v1850 = vadd.f32 %v1599, %v1849
    %v1851 = vpop.f32.mrf.mxu0
    %v1852 = vpop.f32.mrf.mxu0
    %v1853 = vadd.f32 %v1600, %v1852
    %v1854 = vpop.f32.mrf.mxu0
    %1855 = vdwg.mxu0
    %v1857 = vsel %vm1127, %v1332, 0
    %v1860 = vsel %vm1127, %v1333, 0
    %v1863 = vsel %vm1127, %v1334, 0
    %v1866 = vsel %vm1127, %v1335, 0
    %1868 = vmatprep.subr.bf16.mxu0 0
    %1869 = vmatpush1.bf16.msra.mxu0 0
    %1870 = vmatprep.subr.bf16.mxu0 0
    %1871 = vmatpush1.bf16.msra.mxu0 0
    %1872 = vmatprep.subr.bf16.mxu0 0
    %1873 = vmatpush1.bf16.msra.mxu0 0
    %1874 = vmatprep.subr.bf16.mxu0 0
    %1875 = vmatpush1.bf16.msra.mxu0 0
    %1876 = vmatprep.subr.bf16.mxu0 0
    %1877 = vmatpush1.bf16.msra.mxu0 %v1624
    %1878 = vmatprep.subr.bf16.mxu0 0
    %1879 = vmatpush1.bf16.msra.mxu0 %v1623
    %1880 = vmatprep.subr.bf16.mxu0 0
    %1881 = vmatpush1.bf16.msra.mxu0 %v1622
    %1882 = vmatprep.subr.bf16.mxu0 0
    %1883 = vmatpush1.bf16.msra.mxu0 %v1621
    %1884 = vmatprep.subr.bf16.mxu0 0
    %1885 = vmatpush2.bf16.msra.mxu0 0
    %1886 = vmatprep.subr.bf16.mxu0 0
    %1887 = vmatpush2.bf16.msra.mxu0 0
    %1888 = vmatprep.subr.bf16.mxu0 0
    %1889 = vmatpush2.bf16.msra.mxu0 0
    %1890 = vmatprep.subr.bf16.mxu0 0
    %1891 = vmatpush2.bf16.msra.mxu0 0
    %1892 = vmatprep.subr.bf16.mxu0 0
    %1893 = vmatpush2.bf16.msra.mxu0 0
    %1894 = vmatprep.subr.bf16.mxu0 0
    %1895 = vmatpush2.bf16.msra.mxu0 0
    %1896 = vmatprep.subr.bf16.mxu0 0
    %1897 = vmatpush2.bf16.msra.mxu0 0
    %1898 = vmatprep.subr.bf16.mxu0 0
    %1899 = vmatpush2.bf16.msra.mxu0 0
    %1900 = vmatprep.mubr.bf16.mxu0 0
    %1901 = vmatmul.mubr.bf16.gmra.mxu0 %v1857
    %v1902 = vpop.f32.mrf.mxu0
    %v1903 = vadd.f32 %v1601, %v1902
    %v1904 = vpop.f32.mrf.mxu0
    %v1905 = vpop.f32.mrf.mxu0
    %v1906 = vadd.f32 %v1602, %v1905
    %v1907 = vpop.f32.mrf.mxu0
    %1908 = vmatprep.mubr.bf16.mxu0 0
    %1909 = vmatmul.mubr.bf16.gmra.mxu0 %v1860
    %v1910 = vpop.f32.mrf.mxu0
    %v1911 = vadd.f32 %v1603, %v1910
    %v1912 = vpop.f32.mrf.mxu0
    %v1913 = vpop.f32.mrf.mxu0
    %v1914 = vadd.f32 %v1604, %v1913
    %v1915 = vpop.f32.mrf.mxu0
    %1916 = vmatprep.mubr.bf16.mxu0 0
    %1917 = vmatmul.mubr.bf16.gmra.mxu0 %v1863
    %v1918 = vpop.f32.mrf.mxu0
    %v1919 = vadd.f32 %v1605, %v1918
    %v1920 = vpop.f32.mrf.mxu0
    %v1921 = vpop.f32.mrf.mxu0
    %v1922 = vadd.f32 %v1606, %v1921
    %v1923 = vpop.f32.mrf.mxu0
    %1924 = vmatprep.mubr.bf16.mxu0 0
    %1925 = vmatmul.mubr.bf16.gmra.mxu0 %v1866
    %v1926 = vpop.f32.mrf.mxu0
    %v1927 = vadd.f32 %v1607, %v1926
    %v1928 = vpop.f32.mrf.mxu0
    %v1929 = vpop.f32.mrf.mxu0
    %v1930 = vadd.f32 %v1608, %v1929
    %v1931 = vpop.f32.mrf.mxu0
    %1932 = vdwg.mxu0
    %v1933 = vmul.f32 %v1288, %v1672
    %v1934 = vmul.f32 %v1289, %v1675
    %v1935 = vmul.f32 %v1290, %v1680
    %v1936 = vmul.f32 %v1291, %v1683
    %v1937 = vmul.f32 %v1292, %v1688
    %v1938 = vmul.f32 %v1293, %v1691
    %v1939 = vmul.f32 %v1294, %v1696
    %v1940 = vmul.f32 %v1295, %v1699
    %v1941 = vmul.f32 %v1296, %v1749
    %v1942 = vmul.f32 %v1297, %v1752
    %v1943 = vmul.f32 %v1298, %v1757
    %v1944 = vmul.f32 %v1299, %v1760
    %v1945 = vmul.f32 %v1300, %v1765
    %v1946 = vmul.f32 %v1301, %v1768
    %v1947 = vmul.f32 %v1302, %v1773
    %v1948 = vmul.f32 %v1303, %v1776
    %v1949 = vmul.f32 %v1304, %v1826
    %v1950 = vmul.f32 %v1305, %v1829
    %v1951 = vmul.f32 %v1306, %v1834
    %v1952 = vmul.f32 %v1307, %v1837
    %v1953 = vmul.f32 %v1308, %v1842
    %v1954 = vmul.f32 %v1309, %v1845
    %v1955 = vmul.f32 %v1310, %v1850
    %v1956 = vmul.f32 %v1311, %v1853
    %v1957 = vmul.f32 %v1312, %v1903
    %v1958 = vmul.f32 %v1313, %v1906
    %v1959 = vmul.f32 %v1314, %v1911
    %v1960 = vmul.f32 %v1315, %v1914
    %v1961 = vmul.f32 %v1316, %v1919
    %v1962 = vmul.f32 %v1317, %v1922
    %v1963 = vmul.f32 %v1318, %v1927
    %v1964 = vmul.f32 %v1319, %v1930
    %v1965 = vld [vmem:[%s6] sm:$0x1]
    %v1967 = vlaneseq
    %v1968 = vshrl.u32 %v1967, 7
    %v1969 = vsub.s32 0, %v1968
    %v1970 = vrot.slane %v1965, %v1969
    %v1972 = vadd.f32 %v1933, %v1970
    %v1973 = vadd.f32 %v1934, %v1970
    %v1974 = vadd.f32 %v1935, %v1970
    %v1975 = vadd.f32 %v1936, %v1970
    %v1976 = vadd.f32 %v1937, %v1970
    %v1977 = vadd.f32 %v1938, %v1970
    %v1978 = vadd.f32 %v1939, %v1970
    %v1979 = vadd.f32 %v1940, %v1970
    %v1980 = vadd.f32 %v1941, %v1970
    %v1981 = vadd.f32 %v1942, %v1970
    %v1982 = vadd.f32 %v1943, %v1970
    %v1983 = vadd.f32 %v1944, %v1970
    %v1984 = vadd.f32 %v1945, %v1970
    %v1985 = vadd.f32 %v1946, %v1970
    %v1986 = vadd.f32 %v1947, %v1970
    %v1987 = vadd.f32 %v1948, %v1970
    %v1988 = vadd.f32 %v1949, %v1970
    %v1989 = vadd.f32 %v1950, %v1970
    %v1990 = vadd.f32 %v1951, %v1970
    %v1991 = vadd.f32 %v1952, %v1970
    %v1992 = vadd.f32 %v1953, %v1970
    %v1993 = vadd.f32 %v1954, %v1970
    %v1994 = vadd.f32 %v1955, %v1970
    %v1995 = vadd.f32 %v1956, %v1970
    %v1996 = vadd.f32 %v1957, %v1970
    %v1997 = vadd.f32 %v1958, %v1970
    %v1998 = vadd.f32 %v1959, %v1970
    %v1999 = vadd.f32 %v1960, %v1970
    %v2000 = vadd.f32 %v1961, %v1970
    %v2001 = vadd.f32 %v1962, %v1970
    %v2002 = vadd.f32 %v1963, %v1970
    %v2003 = vadd.f32 %v1964, %v1970
    %vm2004 = vcmp.gt.f32.partialorder %v1972, 0.0
    %vm2005 = vcmp.gt.f32.partialorder %v1973, 0.0
    %vm2006 = vcmp.gt.f32.partialorder %v1974, 0.0
    %vm2007 = vcmp.gt.f32.partialorder %v1975, 0.0
    %vm2008 = vcmp.gt.f32.partialorder %v1976, 0.0
    %vm2009 = vcmp.gt.f32.partialorder %v1977, 0.0
    %vm2010 = vcmp.gt.f32.partialorder %v1978, 0.0
    %vm2011 = vcmp.gt.f32.partialorder %v1979, 0.0
    %vm2012 = vcmp.gt.f32.partialorder %v1980, 0.0
    %vm2013 = vcmp.gt.f32.partialorder %v1981, 0.0
    %vm2014 = vcmp.gt.f32.partialorder %v1982, 0.0
    %vm2015 = vcmp.gt.f32.partialorder %v1983, 0.0
    %vm2016 = vcmp.gt.f32.partialorder %v1984, 0.0
    %vm2017 = vcmp.gt.f32.partialorder %v1985, 0.0
    %vm2018 = vcmp.gt.f32.partialorder %v1986, 0.0
    %vm2019 = vcmp.gt.f32.partialorder %v1987, 0.0
    %vm2020 = vcmp.gt.f32.partialorder %v1988, 0.0
    %vm2021 = vcmp.gt.f32.partialorder %v1989, 0.0
    %vm2022 = vcmp.gt.f32.partialorder %v1990, 0.0
    %vm2023 = vcmp.gt.f32.partialorder %v1991, 0.0
    %vm2024 = vcmp.gt.f32.partialorder %v1992, 0.0
    %vm2025 = vcmp.gt.f32.partialorder %v1993, 0.0
    %vm2026 = vcmp.gt.f32.partialorder %v1994, 0.0
    %vm2027 = vcmp.gt.f32.partialorder %v1995, 0.0
    %vm2028 = vcmp.gt.f32.partialorder %v1996, 0.0
    %vm2029 = vcmp.gt.f32.partialorder %v1997, 0.0
    %vm2030 = vcmp.gt.f32.partialorder %v1998, 0.0
    %vm2031 = vcmp.gt.f32.partialorder %v1999, 0.0
    %vm2032 = vcmp.gt.f32.partialorder %v2000, 0.0
    %vm2033 = vcmp.gt.f32.partialorder %v2001, 0.0
    %vm2034 = vcmp.gt.f32.partialorder %v2002, 0.0
    %vm2035 = vcmp.gt.f32.partialorder %v2003, 0.0
    %v2036 = vmul.f32 %v1972, 0.2
    %v2037 = vmul.f32 %v1973, 0.2
    %v2038 = vmul.f32 %v1974, 0.2
    %v2039 = vmul.f32 %v1975, 0.2
    %v2040 = vmul.f32 %v1976, 0.2
    %v2041 = vmul.f32 %v1977, 0.2
    %v2042 = vmul.f32 %v1978, 0.2
    %v2043 = vmul.f32 %v1979, 0.2
    %v2044 = vmul.f32 %v1980, 0.2
    %v2045 = vmul.f32 %v1981, 0.2
    %v2046 = vmul.f32 %v1982, 0.2
    %v2047 = vmul.f32 %v1983, 0.2
    %v2048 = vmul.f32 %v1984, 0.2
    %v2049 = vmul.f32 %v1985, 0.2
    %v2050 = vmul.f32 %v1986, 0.2
    %v2051 = vmul.f32 %v1987, 0.2
    %v2052 = vmul.f32 %v1988, 0.2
    %v2053 = vmul.f32 %v1989, 0.2
    %v2054 = vmul.f32 %v1990, 0.2
    %v2055 = vmul.f32 %v1991, 0.2
    %v2056 = vmul.f32 %v1992, 0.2
    %v2057 = vmul.f32 %v1993, 0.2
    %v2058 = vmul.f32 %v1994, 0.2
    %v2059 = vmul.f32 %v1995, 0.2
    %v2060 = vmul.f32 %v1996, 0.2
    %v2061 = vmul.f32 %v1997, 0.2
    %v2062 = vmul.f32 %v1998, 0.2
    %v2063 = vmul.f32 %v1999, 0.2
    %v2064 = vmul.f32 %v2000, 0.2
    %v2065 = vmul.f32 %v2001, 0.2
    %v2066 = vmul.f32 %v2002, 0.2
    %v2067 = vmul.f32 %v2003, 0.2
    %v2068 = vsel %vm2004, %v1972, %v2036
    %v2069 = vsel %vm2005, %v1973, %v2037
    %v2070 = vsel %vm2006, %v1974, %v2038
    %v2071 = vsel %vm2007, %v1975, %v2039
    %v2072 = vsel %vm2008, %v1976, %v2040
    %v2073 = vsel %vm2009, %v1977, %v2041
    %v2074 = vsel %vm2010, %v1978, %v2042
    %v2075 = vsel %vm2011, %v1979, %v2043
    %v2076 = vsel %vm2012, %v1980, %v2044
    %v2077 = vsel %vm2013, %v1981, %v2045
    %v2078 = vsel %vm2014, %v1982, %v2046
    %v2079 = vsel %vm2015, %v1983, %v2047
    %v2080 = vsel %vm2016, %v1984, %v2048
    %v2081 = vsel %vm2017, %v1985, %v2049
    %v2082 = vsel %vm2018, %v1986, %v2050
    %v2083 = vsel %vm2019, %v1987, %v2051
    %v2084 = vsel %vm2020, %v1988, %v2052
    %v2085 = vsel %vm2021, %v1989, %v2053
    %v2086 = vsel %vm2022, %v1990, %v2054
    %v2087 = vsel %vm2023, %v1991, %v2055
    %v2088 = vsel %vm2024, %v1992, %v2056
    %v2089 = vsel %vm2025, %v1993, %v2057
    %v2090 = vsel %vm2026, %v1994, %v2058
    %v2091 = vsel %vm2027, %v1995, %v2059
    %v2092 = vsel %vm2028, %v1996, %v2060
    %v2093 = vsel %vm2029, %v1997, %v2061
    %v2094 = vsel %vm2030, %v1998, %v2062
    %v2095 = vsel %vm2031, %v1999, %v2063
    %v2096 = vsel %vm2032, %v2000, %v2064
    %v2097 = vsel %vm2033, %v2001, %v2065
    %v2098 = vsel %vm2034, %v2002, %v2066
    %v2099 = vsel %vm2035, %v2003, %v2067
    %v2100 = vadd.f32 %v2068, %v2069
    %v2101 = vadd.f32 %v2100, %v2070
    %v2102 = vadd.f32 %v2101, %v2071
    %v2103 = vadd.f32 %v2102, %v2072
    %v2104 = vadd.f32 %v2103, %v2073
    %v2105 = vadd.f32 %v2104, %v2074
    %v2106 = vadd.f32 %v2105, %v2075
    %v2107 = vrot.slane %v2106, 4
    %v2108 = vadd.f32 %v2106, %v2107
    %v2109 = vrot.slane %v2108, 2
    %v2110 = vadd.f32 %v2108, %v2109
    %v2111 = vrot.slane %v2110, 1
    %v2112 = vadd.f32 %v2110, %v2111
    %v2113 = vadd.f32 %v2076, %v2077
    %v2114 = vadd.f32 %v2113, %v2078
    %v2115 = vadd.f32 %v2114, %v2079
    %v2116 = vadd.f32 %v2115, %v2080
    %v2117 = vadd.f32 %v2116, %v2081
    %v2118 = vadd.f32 %v2117, %v2082
    %v2119 = vadd.f32 %v2118, %v2083
    %v2120 = vrot.slane %v2119, 4
    %v2121 = vadd.f32 %v2119, %v2120
    %v2122 = vrot.slane %v2121, 2
    %v2123 = vadd.f32 %v2121, %v2122
    %v2124 = vrot.slane %v2123, 1
    %v2125 = vadd.f32 %v2123, %v2124
    %v2126 = vadd.f32 %v2084, %v2085
    %v2127 = vadd.f32 %v2126, %v2086
    %v2128 = vadd.f32 %v2127, %v2087
    %v2129 = vadd.f32 %v2128, %v2088
    %v2130 = vadd.f32 %v2129, %v2089
    %v2131 = vadd.f32 %v2130, %v2090
    %v2132 = vadd.f32 %v2131, %v2091
    %v2133 = vrot.slane %v2132, 4
    %v2134 = vadd.f32 %v2132, %v2133
    %v2135 = vrot.slane %v2134, 2
    %v2136 = vadd.f32 %v2134, %v2135
    %v2137 = vrot.slane %v2136, 1
    %v2138 = vadd.f32 %v2136, %v2137
    %v2139 = vadd.f32 %v2092, %v2093
    %v2140 = vadd.f32 %v2139, %v2094
    %v2141 = vadd.f32 %v2140, %v2095
    %v2142 = vadd.f32 %v2141, %v2096
    %v2143 = vadd.f32 %v2142, %v2097
    %v2144 = vadd.f32 %v2143, %v2098
    %v2145 = vadd.f32 %v2144, %v2099
    %v2146 = vrot.slane %v2145, 4
    %v2147 = vadd.f32 %v2145, %v2146
    %v2148 = vrot.slane %v2147, 2
    %v2149 = vadd.f32 %v2147, %v2148
    %v2150 = vrot.slane %v2149, 1
    %v2151 = vadd.f32 %v2149, %v2150
    %v2152 = vrcp.pop 64.0
    %v2153 = vmul.f32 %v2112, %v2152
    %v2154 = vmul.f32 %v2125, %v2152
    %v2155 = vmul.f32 %v2138, %v2152
    %v2156 = vmul.f32 %v2151, %v2152
    %v2157 = vmul.f32 %v2153, 2.0
    %v2158 = vmul.f32 %v2154, 2.0
    %v2159 = vmul.f32 %v2155, 2.0
    %v2160 = vmul.f32 %v2156, 2.0
    %vm2165 = vcmask 1041409
    %v2166 = vsel %vm2165, %v2158, %v2157
    %vm2167 = vcmask 1042434
    %v2168 = vsel %vm2167, %v2159, %v2166
    %vm2169 = vcmask 1043459
    %v2170 = vsel %vm2169, %v2160, %v2168
    %2172 = vst [vmem:[#allocation10] sm:$0xf] %v2170
    // Predicated region
    $region46: #{tpu_custom_call.1} parent=1 // pred_check
      _
    $region47: #{tpu_custom_call.1} parent=1 // pred_check_branch
      %2174 = sbr.rel (0) target = $region49
    $region48: #{tpu_custom_call.1} parent=1 // pred_region
      %s2176 = ssub.s32 64, 64
      %2177 = vsyncadd [#allocation4], %s2176
      %s2179 = sshll.u32 [#allocation10], 4
      %s2180 = int_to_ptr.vmem [resolvable:$true] %s2179
      %2182 = dma.vmem_to_hbm [thread:$0]  %s2180, 64, %s7, [#allocation4]
    $region49: #{tpu_custom_call.1} parent=1 // pred_fallthru
      _
    // Predicated region
    $region50: #{tpu_custom_call.1} parent=1 // pred_check
      _
    $region51: #{tpu_custom_call.1} parent=1 // pred_check_branch
      %2184 = sbr.rel (0) target = $region53
    $region52: #{tpu_custom_call.1} parent=1 // pred_region
      %2185 = dma.done [#allocation4], 64
    $region53: #{tpu_custom_call.1} parent=1 // pred_fallthru
      _
    %2186 = vsyncpa [#allocation3], 1
    %2187 = vsyncpa [#allocation6], 1
    %2188 = vsyncpa [#allocation9], 1
    %2189 = vsyncpa [#allocation4], 1

</llo_original>
